<compile_context>
chip_gen: v7x
topology: tpu7x:2x2x1
jax: 0.10.0
libtpu: 0.0.40
codegen_flags: <defaults>
</compile_context>

<pallas_src>
import numpy as np
import jax
import jax.numpy as jnp
from jax.experimental import pallas as pl
from jax.experimental.pallas import tpu as pltpu

LN_EPS = 1e-5
MASK_FILL = -1e30


def _layer_norm(x, gamma, beta):
    # two-pass (centered) variance: numerically safer than mean(x^2)-mean(x)^2 (review feedback)
    mu = jnp.mean(x, axis=-1, keepdims=True)
    xc = x - mu
    var = jnp.mean(xc * xc, axis=-1, keepdims=True)
    return xc * jax.lax.rsqrt(var + LN_EPS) * gamma + beta


def _make_kernel(n_head, d_k, d_v, store_attn):
    inv_temp = 1.0 / float(np.sqrt(d_k))
    n_qk = n_head * d_k
    bf16 = jnp.bfloat16

    def kernel(x_ref, npm_ref, kmask_ref,
               wqkv_ref, bqkv_ref, wo_ref, bo_ref,
               g1_ref, be1_ref, w1_ref, b1_ref, w2_ref, b2_ref, g2_ref, be2_ref,
               out_ref, *maybe_attn):
        attn_ref = maybe_attn[0] if store_attn else None

        x = x_ref[0]                                   # (L, D) f32 residual
        xb = x.astype(bf16)                            # cast once for the MXU
        npm = npm_ref[0]                               # (L, 1)
        key_bias = kmask_ref[0] * jnp.float32(MASK_FILL)   # (1, L): -1e30 on masked keys, 0 else

        # Fused Q/K/V projection: one MXU pass with N = 2*H*d_k + H*d_v (pre-transposed weights).
        qkv = jnp.dot(xb, wqkv_ref[...],
                      preferred_element_type=jnp.float32) + bqkv_ref[...]   # (L, 2Hdk+Hdv) f32

        probs = []
        ctxs = []
        for h in range(n_head):                        # static unroll; heads are tiny
            qh = qkv[:, h * d_k:(h + 1) * d_k].astype(bf16)                    # (L, d_k)
            kh = qkv[:, n_qk + h * d_k:n_qk + (h + 1) * d_k].astype(bf16)      # (L, d_k)
            vh = qkv[:, 2 * n_qk + h * d_v:2 * n_qk + (h + 1) * d_v].astype(bf16)  # (L, d_v)

            s = jnp.einsum("qd,kd->qk", qh, kh,
                           preferred_element_type=jnp.float32) * inv_temp      # (L, L) f32
            s = s + key_bias                            # additive key-padding bias (broadcast)
            s = s - jnp.max(s, axis=-1, keepdims=True)
            e = jnp.exp(s)
            denom = jnp.sum(e, axis=-1, keepdims=True)
            p = e * pl.reciprocal(denom, approx=True)   # EUP reciprocal, off the VALU path
            probs.append(p)
            ctxs.append(jnp.dot(p.astype(bf16), vh,
                                preferred_element_type=jnp.float32))           # (L, d_v) f32

        if attn_ref is not None:
            # one lane-denser (L, H*L) bf16 store per sequence (head-major along lanes)
            attn_ref[0] = jnp.concatenate(probs, axis=-1).astype(attn_ref.dtype)

        # Single output projection over the concatenated heads: (L, H*d_v) x (H*d_v, D).
        ctx = jnp.concatenate(ctxs, axis=-1).astype(bf16)                      # (L, H*d_v)
        o = jnp.dot(ctx, wo_ref[...], preferred_element_type=jnp.float32) + bo_ref[...]

        # Residual + LN, non-pad mask, position-wise FFN (Conv1d k=1 == dense), LN, mask.
        o = _layer_norm(o + x, g1_ref[...], be1_ref[...])
        o = o * npm
        h1 = jnp.maximum(
            jnp.dot(o.astype(bf16), w1_ref[...], preferred_element_type=jnp.float32)
            + b1_ref[...], 0.0)
        h2 = jnp.dot(h1.astype(bf16), w2_ref[...],
                     preferred_element_type=jnp.float32) + b2_ref[...]
        o2 = _layer_norm(h2 + o, g2_ref[...], be2_ref[...])
        out_ref[0] = (o2 * npm).astype(out_ref.dtype)

    return kernel


def _block_bytes(shape, dtype):
    n = 1
    for s in shape:
        n *= int(s)
    return n * jnp.dtype(dtype).itemsize


def encoder_layer_pallas(enc_input, non_pad_mask, slf_attn_mask, params,
                         n_head, d_k, d_v, return_attn=True):
    B, L, D = enc_input.shape
    bf16 = jnp.bfloat16
    d_inner = params["w1"].shape[0]

    # --- host-side weight prep: fused QKV weight, pre-transposed bf16 matmul weights ----------
    wq_t = params["wq"].T            # (D, H*d_k), head-major columns
    wk_t = params["wk"].T            # (D, H*d_k)
    wv_t = params["wv"].T            # (D, H*d_v)
    wqkv = jnp.concatenate([wq_t, wk_t, wv_t], axis=1).astype(bf16)   # (D, 2*H*d_k + H*d_v)
    bqkv = jnp.concatenate([params["bq"], params["bk"], params["bv"]], axis=1)  # (1, nqkv) f32
    wo = params["wfc"].T.astype(bf16)                                 # (H*d_v, D), head-major rows
    w1_t = params["w1"].T.astype(bf16)                                # (D, d_inner)
    w2_t = params["w2"].T.astype(bf16)                                # (d_inner, D)

    # Key-padding row (B, 1, L): nonzero = masked key (standard broadcast-over-queries mask).
    key_mask = (slf_attn_mask[:, :1, :] != 0.0).astype(jnp.float32)

    ins = [enc_input, non_pad_mask, key_mask,
           wqkv, bqkv, wo, params["bfc"],
           params["g1"], params["be1"],
           w1_t, params["b1"], w2_t, params["b2"], params["g2"], params["be2"]]

    def full_spec(arr):
        nd = arr.ndim
        return pl.BlockSpec(arr.shape, lambda b, _nd=nd: (0,) * _nd)

    in_specs = [
        pl.BlockSpec((1, L, D), lambda b: (b, 0, 0)),     # enc_input
        pl.BlockSpec((1, L, 1), lambda b: (b, 0, 0)),     # non_pad_mask
        pl.BlockSpec((1, 1, L), lambda b: (b, 0, 0)),     # key-padding row
    ] + [full_spec(a) for a in ins[3:]]

    out_specs = [pl.BlockSpec((1, L, D), lambda b: (b, 0, 0))]
    out_shape = [jax.ShapeDtypeStruct((B, L, D), jnp.float32)]
    if return_attn:
        out_specs.append(pl.BlockSpec((1, L, n_head * L), lambda b: (b, 0, 0)))
        out_shape.append(jax.ShapeDtypeStruct((B, L, n_head * L), bf16))

    # VMEM budget derived from actual block footprint (x2 for double-buffering, x2 slack),
    # capped at 32 MiB so we keep >=50% headroom even on v7x's 64 MiB physical VMEM.
    blk = sum(_block_bytes((1,) + a.shape[1:] if i < 3 else a.shape, a.dtype)
              for i, a in enumerate(ins))
    blk += sum(_block_bytes(s.block_shape, o.dtype) for s, o in zip(out_specs, out_shape))
    vmem_limit = int(min(max(4 * blk, 4 << 20), 32 << 20))

    result = pl.pallas_call(
        _make_kernel(n_head, d_k, d_v, return_attn),
        out_shape=tuple(out_shape) if return_attn else out_shape[0],
        grid_spec=pltpu.PrefetchScalarGridSpec(
            num_scalar_prefetch=0,
            grid=(B,),
            in_specs=in_specs,
            out_specs=tuple(out_specs) if return_attn else out_specs[0],
            scratch_shapes=[],
        ),
        compiler_params=pltpu.CompilerParams(
            dimension_semantics=("parallel",),
            vmem_limit_bytes=vmem_limit,
        ),
    )(*ins)

    if not return_attn:
        return result, None
    enc_out, attn = result
    # PyTorch MultiHeadAttention returns attn with shape (n_head * B, L, L), head-major.
    attn = attn.astype(jnp.float32).reshape(B, L, n_head, L).transpose(2, 0, 1, 3)
    return enc_out, attn.reshape(n_head * B, L, L)


# ------------------------- pure-JAX reference (mirrors PyTorch + bf16 MXU casts) ---------------
def encoder_layer_ref(enc_input, non_pad_mask, slf_attn_mask, params, n_head, d_k, d_v):
    bf16 = jnp.bfloat16
    B, L, D = enc_input.shape
    x = enc_input
    xb = x.astype(bf16)
    inv_temp = jnp.float32(1.0 / np.sqrt(d_k))

    def lin(a, w, b):   # nn.Linear: a @ w.T + b, bf16 inputs / f32 accumulation
        return jnp.einsum("bld,nd->bln", a, w.astype(bf16),
                          preferred_element_type=jnp.float32) + b

    q = lin(xb, params["wq"], params["bq"])
    k = lin(xb, params["wk"], params["bk"])
    v = lin(xb, params["wv"], params["bv"])
    qh = q.reshape(B, L, n_head, d_k).transpose(0, 2, 1, 3).astype(bf16)   # (B, H, L, d_k)
    kh = k.reshape(B, L, n_head, d_k).transpose(0, 2, 1, 3).astype(bf16)
    vh = v.reshape(B, L, n_head, d_v).transpose(0, 2, 1, 3).astype(bf16)

    scores = jnp.einsum("bhqd,bhkd->bhqk", qh, kh,
                        preferred_element_type=jnp.float32) * inv_temp
    scores = jnp.where(slf_attn_mask[:, None] != 0.0, jnp.float32(MASK_FILL), scores)
    scores = scores - jnp.max(scores, axis=-1, keepdims=True)
    p = jnp.exp(scores)
    p = p / jnp.sum(p, axis=-1, keepdims=True)                             # (B, H, L, L)

    ctx = jnp.einsum("bhqk,bhkd->bhqd", p.astype(bf16), vh,
                     preferred_element_type=jnp.float32)
    concat = ctx.transpose(0, 2, 1, 3).reshape(B, L, n_head * d_v).astype(bf16)
    o = jnp.einsum("bln,dn->bld", concat, params["wfc"].astype(bf16),
                   preferred_element_type=jnp.float32) + params["bfc"]
    o = _layer_norm(o + x, params["g1"], params["be1"])
    o = o * non_pad_mask

    h1 = jnp.maximum(
        jnp.einsum("bld,nd->bln", o.astype(bf16), params["w1"].astype(bf16),
                   preferred_element_type=jnp.float32) + params["b1"], 0.0)
    h2 = jnp.einsum("bln,dn->bld", h1.astype(bf16), params["w2"].astype(bf16),
                    preferred_element_type=jnp.float32) + params["b2"]
    o2 = _layer_norm(h2 + o, params["g2"], params["be2"])
    o2 = o2 * non_pad_mask

    attn = p.transpose(1, 0, 2, 3).reshape(n_head * B, L, L)
    return o2, attn


def init_params(key, d_model, d_inner, n_head, d_k, d_v):
    ks = jax.random.split(key, 10)
    s = 0.1
    return {
        "wq": jax.random.normal(ks[0], (n_head * d_k, d_model), jnp.float32) * s,
        "bq": jax.random.normal(ks[1], (1, n_head * d_k), jnp.float32) * s,
        "wk": jax.random.normal(ks[2], (n_head * d_k, d_model), jnp.float32) * s,
        "bk": jax.random.normal(ks[3], (1, n_head * d_k), jnp.float32) * s,
        "wv": jax.random.normal(ks[4], (n_head * d_v, d_model), jnp.float32) * s,
        "bv": jax.random.normal(ks[5], (1, n_head * d_v), jnp.float32) * s,
        "wfc": jax.random.normal(ks[6], (d_model, n_head * d_v), jnp.float32) * s,
        "bfc": jax.random.normal(ks[7], (1, d_model), jnp.float32) * s,
        "g1": jnp.ones((1, d_model), jnp.float32),     # LayerNorm default init
        "be1": jnp.zeros((1, d_model), jnp.float32),
        # Conv1d(k=1) weights squeezed to (out, in)
        "w1": jax.random.normal(ks[8], (d_inner, d_model), jnp.float32) * s,
        "b1": jnp.zeros((1, d_inner), jnp.float32),
        "w2": jax.random.normal(ks[9], (d_model, d_inner), jnp.float32) * s,
        "b2": jnp.zeros((1, d_model), jnp.float32),
        "g2": jnp.ones((1, d_model), jnp.float32),
        "be2": jnp.zeros((1, d_model), jnp.float32),
    }


if __name__ == "__main__":
    B, L = 2, 8
    d_model, d_inner, n_head, d_k, d_v = 32, 64, 4, 8, 8

    key = jax.random.PRNGKey(0)
    k_in, k_par = jax.random.split(key)
    enc_input = jax.random.normal(k_in, (B, L, d_model), jnp.float32)

    # Deterministic padding masks: sequence 0 full length, sequence 1 has 2 padded positions.
    lengths = jnp.array([L, L - 2], dtype=jnp.int32)
    pos = jnp.arange(L)
    valid = pos[None, :] < lengths[:, None]                              # (B, L) bool
    non_pad_mask = valid[..., None].astype(jnp.float32)                  # (B, L, 1)
    slf_attn_mask = jnp.broadcast_to(
        jnp.logical_not(valid)[:, None, :], (B, L, L)).astype(jnp.float32)  # nonzero = masked key

    params = init_params(k_par, d_model, d_inner, n_head, d_k, d_v)

    enc_out, attn = encoder_layer_pallas(
        enc_input, non_pad_mask, slf_attn_mask, params, n_head, d_k, d_v, return_attn=True)
    enc_out = jax.block_until_ready(enc_out)
    attn = jax.block_until_ready(attn)

    ref_out, ref_attn = encoder_layer_ref(
        enc_input, non_pad_mask, slf_attn_mask, params, n_head, d_k, d_v)

    # Tolerances: kernel uses the EUP approx reciprocal in softmax and stores attention
    # probabilities in bf16, so allow ~1% slack vs. the f32/exact-divide reference.
    np.testing.assert_allclose(np.asarray(enc_out), np.asarray(ref_out), rtol=1e-2, atol=1e-2)
    np.testing.assert_allclose(np.asarray(attn), np.asarray(ref_attn), rtol=2e-2, atol=8e-3)
    print("KERNEL_OK")
</pallas_src>

<mosaic_0001>
module attributes {stable_mosaic.version = 11 : i64} {
  func.func @kernel(%arg0: i32, %arg1: memref<1x8x32xf32, #tpu.memory_space<vmem>>, %arg2: memref<1x8x1xf32, #tpu.memory_space<vmem>>, %arg3: memref<1x1x8xf32, #tpu.memory_space<vmem>>, %arg4: memref<32x96xbf16, #tpu.memory_space<vmem>>, %arg5: memref<1x96xf32, #tpu.memory_space<vmem>>, %arg6: memref<32x32xbf16, #tpu.memory_space<vmem>>, %arg7: memref<1x32xf32, #tpu.memory_space<vmem>>, %arg8: memref<1x32xf32, #tpu.memory_space<vmem>>, %arg9: memref<1x32xf32, #tpu.memory_space<vmem>>, %arg10: memref<32x64xbf16, #tpu.memory_space<vmem>>, %arg11: memref<1x64xf32, #tpu.memory_space<vmem>>, %arg12: memref<64x32xbf16, #tpu.memory_space<vmem>>, %arg13: memref<1x32xf32, #tpu.memory_space<vmem>>, %arg14: memref<1x32xf32, #tpu.memory_space<vmem>>, %arg15: memref<1x32xf32, #tpu.memory_space<vmem>>, %arg16: memref<1x8x32xf32, #tpu.memory_space<vmem>>, %arg17: memref<1x8x32xbf16, #tpu.memory_space<vmem>>) attributes {dimension_semantics = [#tpu.dimension_semantics<parallel>], iteration_bounds = array<i64: 2>, scalar_prefetch = 0 : i64, scratch_operands = 0 : i64, tpu.core_type = #tpu.core_type<tc>, window_params = [{transform_indices = @transform_0, window_bounds = array<i64: 1, 8, 32>}, {transform_indices = @transform_1, window_bounds = array<i64: 1, 8, 1>}, {transform_indices = @transform_2, window_bounds = array<i64: 1, 1, 8>}, {pipeline_mode = #tpu.pipeline_mode<synchronous>, transform_indices = @transform_3, window_bounds = array<i64: 32, 96>}, {pipeline_mode = #tpu.pipeline_mode<synchronous>, transform_indices = @transform_4, window_bounds = array<i64: 1, 96>}, {pipeline_mode = #tpu.pipeline_mode<synchronous>, transform_indices = @transform_5, window_bounds = array<i64: 32, 32>}, {pipeline_mode = #tpu.pipeline_mode<synchronous>, transform_indices = @transform_6, window_bounds = array<i64: 1, 32>}, {pipeline_mode = #tpu.pipeline_mode<synchronous>, transform_indices = @transform_7, window_bounds = array<i64: 1, 32>}, {pipeline_mode = #tpu.pipeline_mode<synchronous>, transform_indices = @transform_8, window_bounds = array<i64: 1, 32>}, {pipeline_mode = #tpu.pipeline_mode<synchronous>, transform_indices = @transform_9, window_bounds = array<i64: 32, 64>}, {pipeline_mode = #tpu.pipeline_mode<synchronous>, transform_indices = @transform_10, window_bounds = array<i64: 1, 64>}, {pipeline_mode = #tpu.pipeline_mode<synchronous>, transform_indices = @transform_11, window_bounds = array<i64: 64, 32>}, {pipeline_mode = #tpu.pipeline_mode<synchronous>, transform_indices = @transform_12, window_bounds = array<i64: 1, 32>}, {pipeline_mode = #tpu.pipeline_mode<synchronous>, transform_indices = @transform_13, window_bounds = array<i64: 1, 32>}, {pipeline_mode = #tpu.pipeline_mode<synchronous>, transform_indices = @transform_14, window_bounds = array<i64: 1, 32>}, {transform_indices = @transform_15, window_bounds = array<i64: 1, 8, 32>}, {transform_indices = @transform_16, window_bounds = array<i64: 1, 8, 32>}]} {
    %c0 = arith.constant 0 : index
    %c0_0 = arith.constant 0 : index
    %c0_1 = arith.constant 0 : index
    %0 = vector.load %arg1[%c0, %c0_0, %c0_1] : memref<1x8x32xf32, #tpu.memory_space<vmem>>, vector<1x8x32xf32>
    %1 = vector.shape_cast %0 : vector<1x8x32xf32> to vector<8x32xf32>
    %2 = arith.truncf %1 : vector<8x32xf32> to vector<8x32xbf16>
    %c0_2 = arith.constant 0 : index
    %c0_3 = arith.constant 0 : index
    %c0_4 = arith.constant 0 : index
    %3 = vector.load %arg2[%c0_2, %c0_3, %c0_4] : memref<1x8x1xf32, #tpu.memory_space<vmem>>, vector<1x8x1xf32>
    %4 = vector.shape_cast %3 : vector<1x8x1xf32> to vector<8x1xf32>
    %c0_5 = arith.constant 0 : index
    %c0_6 = arith.constant 0 : index
    %c0_7 = arith.constant 0 : index
    %5 = vector.load %arg3[%c0_5, %c0_6, %c0_7] : memref<1x1x8xf32, #tpu.memory_space<vmem>>, vector<1x1x8xf32>
    %6 = vector.shape_cast %5 : vector<1x1x8xf32> to vector<1x8xf32>
    %cst = arith.constant -1.000000e+30 : f32
    %7 = vector.broadcast %cst : f32 to vector<1x8xf32>
    %8 = arith.mulf %6, %7 : vector<1x8xf32>
    %c0_8 = arith.constant 0 : index
    %c0_9 = arith.constant 0 : index
    %9 = vector.load %arg4[%c0_8, %c0_9] : memref<32x96xbf16, #tpu.memory_space<vmem>>, vector<32x96xbf16>
    %cst_10 = arith.constant dense<0.000000e+00> : vector<8x96xf32>
    %10 = tpu.matmul %2, %9, %cst_10 {dimension_numbers = #tpu.dot_dimension_numbers<[1], [0], [0], [1], [0, 0, 1, 1], [], []>} : vector<8x32xbf16>, vector<32x96xbf16>, vector<8x96xf32> -> vector<8x96xf32>
    %c0_11 = arith.constant 0 : index
    %c0_12 = arith.constant 0 : index
    %11 = vector.load %arg5[%c0_11, %c0_12] : memref<1x96xf32, #tpu.memory_space<vmem>>, vector<1x96xf32>
    %12 = vector.broadcast %11 : vector<1x96xf32> to vector<8x96xf32>
    %13 = arith.addf %10, %12 : vector<8x96xf32>
    %14 = vector.extract_strided_slice %13 {offsets = [0, 0], sizes = [8, 8], strides = [1, 1]} : vector<8x96xf32> to vector<8x8xf32>
    %15 = arith.truncf %14 : vector<8x8xf32> to vector<8x8xbf16>
    %16 = vector.extract_strided_slice %13 {offsets = [0, 32], sizes = [8, 8], strides = [1, 1]} : vector<8x96xf32> to vector<8x8xf32>
    %17 = arith.truncf %16 : vector<8x8xf32> to vector<8x8xbf16>
    %18 = vector.extract_strided_slice %13 {offsets = [0, 64], sizes = [8, 8], strides = [1, 1]} : vector<8x96xf32> to vector<8x8xf32>
    %19 = arith.truncf %18 : vector<8x8xf32> to vector<8x8xbf16>
    "tpu.trace_start"() <{level = 10 : i32, message = "qd,kd->qk"}> : () -> ()
    %cst_13 = arith.constant dense<0.000000e+00> : vector<8x8xf32>
    %20 = tpu.matmul %15, %17, %cst_13 {dimension_numbers = #tpu.dot_dimension_numbers<[1], [1], [0], [0], [0, 0, 1, 0], [], []>} : vector<8x8xbf16>, vector<8x8xbf16>, vector<8x8xf32> -> vector<8x8xf32>
    "tpu.trace_stop"() : () -> ()
    %cst_14 = arith.constant 0.353553385 : f32
    %21 = vector.broadcast %cst_14 : f32 to vector<8x8xf32>
    %22 = arith.mulf %20, %21 : vector<8x8xf32>
    %23 = vector.broadcast %8 : vector<1x8xf32> to vector<8x8xf32>
    %24 = arith.addf %22, %23 : vector<8x8xf32>
    %cst_15 = arith.constant dense<0xFF800000> : vector<8xf32>
    %25 = vector.multi_reduction <maximumf>, %24, %cst_15 [1] : vector<8x8xf32> to vector<8xf32>
    %26 = vector.shape_cast %25 : vector<8xf32> to vector<8x1xf32>
    %27 = vector.broadcast %26 : vector<8x1xf32> to vector<8x8xf32>
    %28 = arith.subf %24, %27 : vector<8x8xf32>
    %29 = math.exp %28 : vector<8x8xf32>
    %cst_16 = arith.constant dense<0.000000e+00> : vector<8xf32>
    %30 = vector.multi_reduction <add>, %29, %cst_16 [1] : vector<8x8xf32> to vector<8xf32>
    %31 = vector.shape_cast %30 : vector<8xf32> to vector<8x1xf32>
    %32 = tpu.reciprocal %31 {approx = true} : vector<8x1xf32> -> vector<8x1xf32>
    %33 = vector.broadcast %32 : vector<8x1xf32> to vector<8x8xf32>
    %34 = arith.mulf %29, %33 : vector<8x8xf32>
    %35 = arith.truncf %34 : vector<8x8xf32> to vector<8x8xbf16>
    %cst_17 = arith.constant dense<0.000000e+00> : vector<8x8xf32>
    %36 = tpu.matmul %35, %19, %cst_17 {dimension_numbers = #tpu.dot_dimension_numbers<[1], [0], [0], [1], [0, 0, 1, 1], [], []>} : vector<8x8xbf16>, vector<8x8xbf16>, vector<8x8xf32> -> vector<8x8xf32>
    %37 = vector.extract_strided_slice %13 {offsets = [0, 8], sizes = [8, 8], strides = [1, 1]} : vector<8x96xf32> to vector<8x8xf32>
    %38 = arith.truncf %37 : vector<8x8xf32> to vector<8x8xbf16>
    %39 = vector.extract_strided_slice %13 {offsets = [0, 40], sizes = [8, 8], strides = [1, 1]} : vector<8x96xf32> to vector<8x8xf32>
    %40 = arith.truncf %39 : vector<8x8xf32> to vector<8x8xbf16>
    %41 = vector.extract_strided_slice %13 {offsets = [0, 72], sizes = [8, 8], strides = [1, 1]} : vector<8x96xf32> to vector<8x8xf32>
    %42 = arith.truncf %41 : vector<8x8xf32> to vector<8x8xbf16>
    "tpu.trace_start"() <{level = 10 : i32, message = "qd,kd->qk"}> : () -> ()
    %cst_18 = arith.constant dense<0.000000e+00> : vector<8x8xf32>
    %43 = tpu.matmul %38, %40, %cst_18 {dimension_numbers = #tpu.dot_dimension_numbers<[1], [1], [0], [0], [0, 0, 1, 0], [], []>} : vector<8x8xbf16>, vector<8x8xbf16>, vector<8x8xf32> -> vector<8x8xf32>
    "tpu.trace_stop"() : () -> ()
    %cst_19 = arith.constant 0.353553385 : f32
    %44 = vector.broadcast %cst_19 : f32 to vector<8x8xf32>
    %45 = arith.mulf %43, %44 : vector<8x8xf32>
    %46 = vector.broadcast %8 : vector<1x8xf32> to vector<8x8xf32>
    %47 = arith.addf %45, %46 : vector<8x8xf32>
    %cst_20 = arith.constant dense<0xFF800000> : vector<8xf32>
    %48 = vector.multi_reduction <maximumf>, %47, %cst_20 [1] : vector<8x8xf32> to vector<8xf32>
    %49 = vector.shape_cast %48 : vector<8xf32> to vector<8x1xf32>
    %50 = vector.broadcast %49 : vector<8x1xf32> to vector<8x8xf32>
    %51 = arith.subf %47, %50 : vector<8x8xf32>
    %52 = math.exp %51 : vector<8x8xf32>
    %cst_21 = arith.constant dense<0.000000e+00> : vector<8xf32>
    %53 = vector.multi_reduction <add>, %52, %cst_21 [1] : vector<8x8xf32> to vector<8xf32>
    %54 = vector.shape_cast %53 : vector<8xf32> to vector<8x1xf32>
    %55 = tpu.reciprocal %54 {approx = true} : vector<8x1xf32> -> vector<8x1xf32>
    %56 = vector.broadcast %55 : vector<8x1xf32> to vector<8x8xf32>
    %57 = arith.mulf %52, %56 : vector<8x8xf32>
    %58 = arith.truncf %57 : vector<8x8xf32> to vector<8x8xbf16>
    %cst_22 = arith.constant dense<0.000000e+00> : vector<8x8xf32>
    %59 = tpu.matmul %58, %42, %cst_22 {dimension_numbers = #tpu.dot_dimension_numbers<[1], [0], [0], [1], [0, 0, 1, 1], [], []>} : vector<8x8xbf16>, vector<8x8xbf16>, vector<8x8xf32> -> vector<8x8xf32>
    %60 = vector.extract_strided_slice %13 {offsets = [0, 16], sizes = [8, 8], strides = [1, 1]} : vector<8x96xf32> to vector<8x8xf32>
    %61 = arith.truncf %60 : vector<8x8xf32> to vector<8x8xbf16>
    %62 = vector.extract_strided_slice %13 {offsets = [0, 48], sizes = [8, 8], strides = [1, 1]} : vector<8x96xf32> to vector<8x8xf32>
    %63 = arith.truncf %62 : vector<8x8xf32> to vector<8x8xbf16>
    %64 = vector.extract_strided_slice %13 {offsets = [0, 80], sizes = [8, 8], strides = [1, 1]} : vector<8x96xf32> to vector<8x8xf32>
    %65 = arith.truncf %64 : vector<8x8xf32> to vector<8x8xbf16>
    "tpu.trace_start"() <{level = 10 : i32, message = "qd,kd->qk"}> : () -> ()
    %cst_23 = arith.constant dense<0.000000e+00> : vector<8x8xf32>
    %66 = tpu.matmul %61, %63, %cst_23 {dimension_numbers = #tpu.dot_dimension_numbers<[1], [1], [0], [0], [0, 0, 1, 0], [], []>} : vector<8x8xbf16>, vector<8x8xbf16>, vector<8x8xf32> -> vector<8x8xf32>
    "tpu.trace_stop"() : () -> ()
    %cst_24 = arith.constant 0.353553385 : f32
    %67 = vector.broadcast %cst_24 : f32 to vector<8x8xf32>
    %68 = arith.mulf %66, %67 : vector<8x8xf32>
    %69 = vector.broadcast %8 : vector<1x8xf32> to vector<8x8xf32>
    %70 = arith.addf %68, %69 : vector<8x8xf32>
    %cst_25 = arith.constant dense<0xFF800000> : vector<8xf32>
    %71 = vector.multi_reduction <maximumf>, %70, %cst_25 [1] : vector<8x8xf32> to vector<8xf32>
    %72 = vector.shape_cast %71 : vector<8xf32> to vector<8x1xf32>
    %73 = vector.broadcast %72 : vector<8x1xf32> to vector<8x8xf32>
    %74 = arith.subf %70, %73 : vector<8x8xf32>
    %75 = math.exp %74 : vector<8x8xf32>
    %cst_26 = arith.constant dense<0.000000e+00> : vector<8xf32>
    %76 = vector.multi_reduction <add>, %75, %cst_26 [1] : vector<8x8xf32> to vector<8xf32>
    %77 = vector.shape_cast %76 : vector<8xf32> to vector<8x1xf32>
    %78 = tpu.reciprocal %77 {approx = true} : vector<8x1xf32> -> vector<8x1xf32>
    %79 = vector.broadcast %78 : vector<8x1xf32> to vector<8x8xf32>
    %80 = arith.mulf %75, %79 : vector<8x8xf32>
    %81 = arith.truncf %80 : vector<8x8xf32> to vector<8x8xbf16>
    %cst_27 = arith.constant dense<0.000000e+00> : vector<8x8xf32>
    %82 = tpu.matmul %81, %65, %cst_27 {dimension_numbers = #tpu.dot_dimension_numbers<[1], [0], [0], [1], [0, 0, 1, 1], [], []>} : vector<8x8xbf16>, vector<8x8xbf16>, vector<8x8xf32> -> vector<8x8xf32>
    %83 = vector.extract_strided_slice %13 {offsets = [0, 24], sizes = [8, 8], strides = [1, 1]} : vector<8x96xf32> to vector<8x8xf32>
    %84 = arith.truncf %83 : vector<8x8xf32> to vector<8x8xbf16>
    %85 = vector.extract_strided_slice %13 {offsets = [0, 56], sizes = [8, 8], strides = [1, 1]} : vector<8x96xf32> to vector<8x8xf32>
    %86 = arith.truncf %85 : vector<8x8xf32> to vector<8x8xbf16>
    %87 = vector.extract_strided_slice %13 {offsets = [0, 88], sizes = [8, 8], strides = [1, 1]} : vector<8x96xf32> to vector<8x8xf32>
    %88 = arith.truncf %87 : vector<8x8xf32> to vector<8x8xbf16>
    "tpu.trace_start"() <{level = 10 : i32, message = "qd,kd->qk"}> : () -> ()
    %cst_28 = arith.constant dense<0.000000e+00> : vector<8x8xf32>
    %89 = tpu.matmul %84, %86, %cst_28 {dimension_numbers = #tpu.dot_dimension_numbers<[1], [1], [0], [0], [0, 0, 1, 0], [], []>} : vector<8x8xbf16>, vector<8x8xbf16>, vector<8x8xf32> -> vector<8x8xf32>
    "tpu.trace_stop"() : () -> ()
    %cst_29 = arith.constant 0.353553385 : f32
    %90 = vector.broadcast %cst_29 : f32 to vector<8x8xf32>
    %91 = arith.mulf %89, %90 : vector<8x8xf32>
    %92 = vector.broadcast %8 : vector<1x8xf32> to vector<8x8xf32>
    %93 = arith.addf %91, %92 : vector<8x8xf32>
    %cst_30 = arith.constant dense<0xFF800000> : vector<8xf32>
    %94 = vector.multi_reduction <maximumf>, %93, %cst_30 [1] : vector<8x8xf32> to vector<8xf32>
    %95 = vector.shape_cast %94 : vector<8xf32> to vector<8x1xf32>
    %96 = vector.broadcast %95 : vector<8x1xf32> to vector<8x8xf32>
    %97 = arith.subf %93, %96 : vector<8x8xf32>
    %98 = math.exp %97 : vector<8x8xf32>
    %cst_31 = arith.constant dense<0.000000e+00> : vector<8xf32>
    %99 = vector.multi_reduction <add>, %98, %cst_31 [1] : vector<8x8xf32> to vector<8xf32>
    %100 = vector.shape_cast %99 : vector<8xf32> to vector<8x1xf32>
    %101 = tpu.reciprocal %100 {approx = true} : vector<8x1xf32> -> vector<8x1xf32>
    %102 = vector.broadcast %101 : vector<8x1xf32> to vector<8x8xf32>
    %103 = arith.mulf %98, %102 : vector<8x8xf32>
    %104 = arith.truncf %103 : vector<8x8xf32> to vector<8x8xbf16>
    %cst_32 = arith.constant dense<0.000000e+00> : vector<8x8xf32>
    %105 = tpu.matmul %104, %88, %cst_32 {dimension_numbers = #tpu.dot_dimension_numbers<[1], [0], [0], [1], [0, 0, 1, 1], [], []>} : vector<8x8xbf16>, vector<8x8xbf16>, vector<8x8xf32> -> vector<8x8xf32>
    %106 = tpu.concatenate %34, %57, %80, %103 in 1 : vector<8x8xf32>, vector<8x8xf32>, vector<8x8xf32>, vector<8x8xf32> -> vector<8x32xf32>
    %107 = arith.truncf %106 : vector<8x32xf32> to vector<8x32xbf16>
    %c0_33 = arith.constant 0 : index
    %c0_34 = arith.constant 0 : index
    %c0_35 = arith.constant 0 : index
    %108 = vector.load %arg17[%c0_33, %c0_34, %c0_35] : memref<1x8x32xbf16, #tpu.memory_space<vmem>>, vector<1x8x32xbf16>
    %109 = vector.shape_cast %108 : vector<1x8x32xbf16> to vector<8x32xbf16>
    %110 = vector.shape_cast %107 : vector<8x32xbf16> to vector<1x8x32xbf16>
    tpu.vector_store %arg17[%c0_33, %c0_34, %c0_35], %110 {strides = array<i32>} : memref<1x8x32xbf16, #tpu.memory_space<vmem>>, vector<1x8x32xbf16>,
    %111 = tpu.concatenate %36, %59, %82, %105 in 1 : vector<8x8xf32>, vector<8x8xf32>, vector<8x8xf32>, vector<8x8xf32> -> vector<8x32xf32>
    %112 = arith.truncf %111 : vector<8x32xf32> to vector<8x32xbf16>
    %c0_36 = arith.constant 0 : index
    %c0_37 = arith.constant 0 : index
    %113 = vector.load %arg6[%c0_36, %c0_37] : memref<32x32xbf16, #tpu.memory_space<vmem>>, vector<32x32xbf16>
    %cst_38 = arith.constant dense<0.000000e+00> : vector<8x32xf32>
    %114 = tpu.matmul %112, %113, %cst_38 {dimension_numbers = #tpu.dot_dimension_numbers<[1], [0], [0], [1], [0, 0, 1, 1], [], []>} : vector<8x32xbf16>, vector<32x32xbf16>, vector<8x32xf32> -> vector<8x32xf32>
    %c0_39 = arith.constant 0 : index
    %c0_40 = arith.constant 0 : index
    %115 = vector.load %arg7[%c0_39, %c0_40] : memref<1x32xf32, #tpu.memory_space<vmem>>, vector<1x32xf32>
    %116 = vector.broadcast %115 : vector<1x32xf32> to vector<8x32xf32>
    %117 = arith.addf %114, %116 : vector<8x32xf32>
    %118 = arith.addf %117, %1 : vector<8x32xf32>
    %c0_41 = arith.constant 0 : index
    %c0_42 = arith.constant 0 : index
    %119 = vector.load %arg8[%c0_41, %c0_42] : memref<1x32xf32, #tpu.memory_space<vmem>>, vector<1x32xf32>
    %c0_43 = arith.constant 0 : index
    %c0_44 = arith.constant 0 : index
    %120 = vector.load %arg9[%c0_43, %c0_44] : memref<1x32xf32, #tpu.memory_space<vmem>>, vector<1x32xf32>
    %cst_45 = arith.constant dense<0.000000e+00> : vector<8xf32>
    %121 = vector.multi_reduction <add>, %118, %cst_45 [1] : vector<8x32xf32> to vector<8xf32>
    %122 = vector.shape_cast %121 : vector<8xf32> to vector<8x1xf32>
    %cst_46 = arith.constant 3.200000e+01 : f32
    %123 = vector.broadcast %cst_46 : f32 to vector<8x1xf32>
    %124 = arith.divf %122, %123 : vector<8x1xf32>
    %125 = vector.broadcast %124 : vector<8x1xf32> to vector<8x32xf32>
    %126 = arith.subf %118, %125 : vector<8x32xf32>
    %127 = arith.mulf %126, %126 : vector<8x32xf32>
    %cst_47 = arith.constant dense<0.000000e+00> : vector<8xf32>
    %128 = vector.multi_reduction <add>, %127, %cst_47 [1] : vector<8x32xf32> to vector<8xf32>
    %129 = vector.shape_cast %128 : vector<8xf32> to vector<8x1xf32>
    %cst_48 = arith.constant 3.200000e+01 : f32
    %130 = vector.broadcast %cst_48 : f32 to vector<8x1xf32>
    %131 = arith.divf %129, %130 : vector<8x1xf32>
    %cst_49 = arith.constant 9.99999974E-6 : f32
    %132 = vector.broadcast %cst_49 : f32 to vector<8x1xf32>
    %133 = arith.addf %131, %132 : vector<8x1xf32>
    %134 = math.rsqrt %133 : vector<8x1xf32>
    %135 = vector.broadcast %134 : vector<8x1xf32> to vector<8x32xf32>
    %136 = arith.mulf %126, %135 : vector<8x32xf32>
    %137 = vector.broadcast %119 : vector<1x32xf32> to vector<8x32xf32>
    %138 = arith.mulf %136, %137 : vector<8x32xf32>
    %139 = vector.broadcast %120 : vector<1x32xf32> to vector<8x32xf32>
    %140 = arith.addf %138, %139 : vector<8x32xf32>
    %141 = vector.broadcast %4 : vector<8x1xf32> to vector<8x32xf32>
    %142 = arith.mulf %140, %141 : vector<8x32xf32>
    %143 = arith.truncf %142 : vector<8x32xf32> to vector<8x32xbf16>
    %c0_50 = arith.constant 0 : index
    %c0_51 = arith.constant 0 : index
    %144 = vector.load %arg10[%c0_50, %c0_51] : memref<32x64xbf16, #tpu.memory_space<vmem>>, vector<32x64xbf16>
    %cst_52 = arith.constant dense<0.000000e+00> : vector<8x64xf32>
    %145 = tpu.matmul %143, %144, %cst_52 {dimension_numbers = #tpu.dot_dimension_numbers<[1], [0], [0], [1], [0, 0, 1, 1], [], []>} : vector<8x32xbf16>, vector<32x64xbf16>, vector<8x64xf32> -> vector<8x64xf32>
    %c0_53 = arith.constant 0 : index
    %c0_54 = arith.constant 0 : index
    %146 = vector.load %arg11[%c0_53, %c0_54] : memref<1x64xf32, #tpu.memory_space<vmem>>, vector<1x64xf32>
    %147 = vector.broadcast %146 : vector<1x64xf32> to vector<8x64xf32>
    %148 = arith.addf %145, %147 : vector<8x64xf32>
    %cst_55 = arith.constant 0.000000e+00 : f32
    %149 = vector.broadcast %cst_55 : f32 to vector<8x64xf32>
    %150 = arith.maximumf %148, %149 : vector<8x64xf32>
    %151 = arith.truncf %150 : vector<8x64xf32> to vector<8x64xbf16>
    %c0_56 = arith.constant 0 : index
    %c0_57 = arith.constant 0 : index
    %152 = vector.load %arg12[%c0_56, %c0_57] : memref<64x32xbf16, #tpu.memory_space<vmem>>, vector<64x32xbf16>
    %cst_58 = arith.constant dense<0.000000e+00> : vector<8x32xf32>
    %153 = tpu.matmul %151, %152, %cst_58 {dimension_numbers = #tpu.dot_dimension_numbers<[1], [0], [0], [1], [0, 0, 1, 1], [], []>} : vector<8x64xbf16>, vector<64x32xbf16>, vector<8x32xf32> -> vector<8x32xf32>
    %c0_59 = arith.constant 0 : index
    %c0_60 = arith.constant 0 : index
    %154 = vector.load %arg13[%c0_59, %c0_60] : memref<1x32xf32, #tpu.memory_space<vmem>>, vector<1x32xf32>
    %155 = vector.broadcast %154 : vector<1x32xf32> to vector<8x32xf32>
    %156 = arith.addf %153, %155 : vector<8x32xf32>
    %157 = arith.addf %156, %142 : vector<8x32xf32>
    %c0_61 = arith.constant 0 : index
    %c0_62 = arith.constant 0 : index
    %158 = vector.load %arg14[%c0_61, %c0_62] : memref<1x32xf32, #tpu.memory_space<vmem>>, vector<1x32xf32>
    %c0_63 = arith.constant 0 : index
    %c0_64 = arith.constant 0 : index
    %159 = vector.load %arg15[%c0_63, %c0_64] : memref<1x32xf32, #tpu.memory_space<vmem>>, vector<1x32xf32>
    %cst_65 = arith.constant dense<0.000000e+00> : vector<8xf32>
    %160 = vector.multi_reduction <add>, %157, %cst_65 [1] : vector<8x32xf32> to vector<8xf32>
    %161 = vector.shape_cast %160 : vector<8xf32> to vector<8x1xf32>
    %cst_66 = arith.constant 3.200000e+01 : f32
    %162 = vector.broadcast %cst_66 : f32 to vector<8x1xf32>
    %163 = arith.divf %161, %162 : vector<8x1xf32>
    %164 = vector.broadcast %163 : vector<8x1xf32> to vector<8x32xf32>
    %165 = arith.subf %157, %164 : vector<8x32xf32>
    %166 = arith.mulf %165, %165 : vector<8x32xf32>
    %cst_67 = arith.constant dense<0.000000e+00> : vector<8xf32>
    %167 = vector.multi_reduction <add>, %166, %cst_67 [1] : vector<8x32xf32> to vector<8xf32>
    %168 = vector.shape_cast %167 : vector<8xf32> to vector<8x1xf32>
    %cst_68 = arith.constant 3.200000e+01 : f32
    %169 = vector.broadcast %cst_68 : f32 to vector<8x1xf32>
    %170 = arith.divf %168, %169 : vector<8x1xf32>
    %cst_69 = arith.constant 9.99999974E-6 : f32
    %171 = vector.broadcast %cst_69 : f32 to vector<8x1xf32>
    %172 = arith.addf %170, %171 : vector<8x1xf32>
    %173 = math.rsqrt %172 : vector<8x1xf32>
    %174 = vector.broadcast %173 : vector<8x1xf32> to vector<8x32xf32>
    %175 = arith.mulf %165, %174 : vector<8x32xf32>
    %176 = vector.broadcast %158 : vector<1x32xf32> to vector<8x32xf32>
    %177 = arith.mulf %175, %176 : vector<8x32xf32>
    %178 = vector.broadcast %159 : vector<1x32xf32> to vector<8x32xf32>
    %179 = arith.addf %177, %178 : vector<8x32xf32>
    %180 = vector.broadcast %4 : vector<8x1xf32> to vector<8x32xf32>
    %181 = arith.mulf %179, %180 : vector<8x32xf32>
    %c0_70 = arith.constant 0 : index
    %c0_71 = arith.constant 0 : index
    %c0_72 = arith.constant 0 : index
    %182 = vector.load %arg16[%c0_70, %c0_71, %c0_72] : memref<1x8x32xf32, #tpu.memory_space<vmem>>, vector<1x8x32xf32>
    %183 = vector.shape_cast %182 : vector<1x8x32xf32> to vector<8x32xf32>
    %184 = vector.shape_cast %181 : vector<8x32xf32> to vector<1x8x32xf32>
    tpu.vector_store %arg16[%c0_70, %c0_71, %c0_72], %184 {strides = array<i32>} : memref<1x8x32xf32, #tpu.memory_space<vmem>>, vector<1x8x32xf32>,
    return
  }
  func.func @transform_0(%arg0: i32) -> (i32, i32, i32) {
    %c0_i32 = arith.constant 0 : i32
    %c0_i32_0 = arith.constant 0 : i32
    %c0_i32_1 = arith.constant 0 : i32
    return %arg0, %c0_i32, %c0_i32_0 : i32, i32, i32
  }
  func.func @transform_1(%arg0: i32) -> (i32, i32, i32) {
    %c0_i32 = arith.constant 0 : i32
    %c0_i32_0 = arith.constant 0 : i32
    %c0_i32_1 = arith.constant 0 : i32
    return %arg0, %c0_i32, %c0_i32_0 : i32, i32, i32
  }
  func.func @transform_2(%arg0: i32) -> (i32, i32, i32) {
    %c0_i32 = arith.constant 0 : i32
    %c0_i32_0 = arith.constant 0 : i32
    %c0_i32_1 = arith.constant 0 : i32
    return %arg0, %c0_i32, %c0_i32_0 : i32, i32, i32
  }
  func.func @transform_3(%arg0: i32) -> (i32, i32) {
    %c0_i32 = arith.constant 0 : i32
    %c0_i32_0 = arith.constant 0 : i32
    %c0_i32_1 = arith.constant 0 : i32
    return %c0_i32, %c0_i32_0 : i32, i32
  }
  func.func @transform_4(%arg0: i32) -> (i32, i32) {
    %c0_i32 = arith.constant 0 : i32
    %c0_i32_0 = arith.constant 0 : i32
    %c0_i32_1 = arith.constant 0 : i32
    return %c0_i32, %c0_i32_0 : i32, i32
  }
  func.func @transform_5(%arg0: i32) -> (i32, i32) {
    %c0_i32 = arith.constant 0 : i32
    %c0_i32_0 = arith.constant 0 : i32
    %c0_i32_1 = arith.constant 0 : i32
    return %c0_i32, %c0_i32_0 : i32, i32
  }
  func.func @transform_6(%arg0: i32) -> (i32, i32) {
    %c0_i32 = arith.constant 0 : i32
    %c0_i32_0 = arith.constant 0 : i32
    %c0_i32_1 = arith.constant 0 : i32
    return %c0_i32, %c0_i32_0 : i32, i32
  }
  func.func @transform_7(%arg0: i32) -> (i32, i32) {
    %c0_i32 = arith.constant 0 : i32
    %c0_i32_0 = arith.constant 0 : i32
    %c0_i32_1 = arith.constant 0 : i32
    return %c0_i32, %c0_i32_0 : i32, i32
  }
  func.func @transform_8(%arg0: i32) -> (i32, i32) {
    %c0_i32 = arith.constant 0 : i32
    %c0_i32_0 = arith.constant 0 : i32
    %c0_i32_1 = arith.constant 0 : i32
    return %c0_i32, %c0_i32_0 : i32, i32
  }
  func.func @transform_9(%arg0: i32) -> (i32, i32) {
    %c0_i32 = arith.constant 0 : i32
    %c0_i32_0 = arith.constant 0 : i32
    %c0_i32_1 = arith.constant 0 : i32
    return %c0_i32, %c0_i32_0 : i32, i32
  }
  func.func @transform_10(%arg0: i32) -> (i32, i32) {
    %c0_i32 = arith.constant 0 : i32
    %c0_i32_0 = arith.constant 0 : i32
    %c0_i32_1 = arith.constant 0 : i32
    return %c0_i32, %c0_i32_0 : i32, i32
  }
  func.func @transform_11(%arg0: i32) -> (i32, i32) {
    %c0_i32 = arith.constant 0 : i32
    %c0_i32_0 = arith.constant 0 : i32
    %c0_i32_1 = arith.constant 0 : i32
    return %c0_i32, %c0_i32_0 : i32, i32
  }
  func.func @transform_12(%arg0: i32) -> (i32, i32) {
    %c0_i32 = arith.constant 0 : i32
    %c0_i32_0 = arith.constant 0 : i32
    %c0_i32_1 = arith.constant 0 : i32
    return %c0_i32, %c0_i32_0 : i32, i32
  }
  func.func @transform_13(%arg0: i32) -> (i32, i32) {
    %c0_i32 = arith.constant 0 : i32
    %c0_i32_0 = arith.constant 0 : i32
    %c0_i32_1 = arith.constant 0 : i32
    return %c0_i32, %c0_i32_0 : i32, i32
  }
  func.func @transform_14(%arg0: i32) -> (i32, i32) {
    %c0_i32 = arith.constant 0 : i32
    %c0_i32_0 = arith.constant 0 : i32
    %c0_i32_1 = arith.constant 0 : i32
    return %c0_i32, %c0_i32_0 : i32, i32
  }
  func.func @transform_15(%arg0: i32) -> (i32, i32, i32) {
    %c0_i32 = arith.constant 0 : i32
    %c0_i32_0 = arith.constant 0 : i32
    %c0_i32_1 = arith.constant 0 : i32
    return %arg0, %c0_i32, %c0_i32_0 : i32, i32, i32
  }
  func.func @transform_16(%arg0: i32) -> (i32, i32, i32) {
    %c0_i32 = arith.constant 0 : i32
    %c0_i32_0 = arith.constant 0 : i32
    %c0_i32_1 = arith.constant 0 : i32
    return %arg0, %c0_i32, %c0_i32_0 : i32, i32, i32
  }
}

</mosaic_0001>

<llo_original>
// kernel: tpu_custom_call.1
$region0: #{tpu_custom_call.1}
  #allocation0 [shape = 'u32[]', space=smem, size = 0x4, offset = 0x4, fixed_abs, tag = 'smem constant byte address 0x4 - core index']
  #allocation1 [shape = 'u32[144,128]{1,0:T(1,128)}', space=vmem, size = 0x12000, scoped, tag = 'internal scratch']
  %s0 = inlined_call_operand.vmem [shape: f32[2,8,32], index: 0, kind: input, shape index: {}]
  %s1 = inlined_call_operand.vmem [shape: f32[2,8,1], index: 1, kind: input, shape index: {}]
  %s2 = inlined_call_operand.hbm [shape: f32[2,1,8], index: 2, kind: input, shape index: {}]
  %s3 = inlined_call_operand.vmem [shape: bf16[32,96], index: 3, kind: input, shape index: {}]
  %s4 = inlined_call_operand.vmem [shape: f32[1,96], index: 4, kind: input, shape index: {}]
  %s5 = inlined_call_operand.vmem [shape: bf16[32,32], index: 5, kind: input, shape index: {}]
  %s6 = inlined_call_operand.vmem [shape: f32[1,32], index: 6, kind: input, shape index: {}]
  %s7 = inlined_call_operand.vmem [shape: f32[1,32], index: 7, kind: input, shape index: {}]
  %s8 = inlined_call_operand.vmem [shape: f32[1,32], index: 8, kind: input, shape index: {}]
  %s9 = inlined_call_operand.vmem [shape: bf16[32,64], index: 9, kind: input, shape index: {}]
  %s10 = inlined_call_operand.vmem [shape: f32[1,64], index: 10, kind: input, shape index: {}]
  %s11 = inlined_call_operand.vmem [shape: bf16[64,32], index: 11, kind: input, shape index: {}]
  %s12 = inlined_call_operand.vmem [shape: f32[1,32], index: 12, kind: input, shape index: {}]
  %s13 = inlined_call_operand.vmem [shape: f32[1,32], index: 13, kind: input, shape index: {}]
  %s14 = inlined_call_operand.vmem [shape: f32[1,32], index: 14, kind: input, shape index: {}]
  %s15 = inlined_call_operand.hbm [shape: f32[2,8,32], index: 15, kind: output, shape index: {0}]
  %s16 = inlined_call_operand.hbm [shape: bf16[2,8,32], index: 16, kind: output, shape index: {1}]
  %17 = xla_tuple %s15, %s16
  %s18 = sld [smem:[#allocation0]]
  $region105: #{tpu_custom_call.1} parent=0
    _
  %s20 = ssub.s32 1, %s18
  %s21 = scalar_select 0, %s20, %s18
  $region1: #{tpu_custom_call.1} parent=0
    #allocation2 [shape = 'u8[1024]{0}', space=vmem, size = 0x400, scoped, tag = 'input window, operand 2']
    #allocation3 [shape = 's32[2]{0}', space=sflag, size = 0x8, scoped, tag = 'scoped memory for tpu_custom_call.1']
    #allocation4 [shape = 's32[2]{0}', space=sflag, size = 0x8, scoped, tag = 'scoped memory for tpu_custom_call.1']
    #allocation5 [shape = 'u8[8192]{0}', space=vmem, size = 0x2000, scoped, tag = 'output window, operand 0']
    #allocation6 [shape = 'u8[4096]{0}', space=vmem, size = 0x1000, scoped, tag = 'output window, operand 1']
    #allocation7 [shape = 's32[2]{0}', space=sflag, size = 0x8, scoped, tag = 'scoped memory for tpu_custom_call.1']
    %22 = vsyncpa [#allocation3], 0
    %s23 = scalar_lea.sflag [#allocation3], 1
    %24 = vsyncpa %s23, 0
    %25 = vsyncpa [#allocation4], 0
    %s26 = scalar_lea.sflag [#allocation4], 1
    %27 = vsyncpa %s26, 0
    %28 = vsyncpa [#allocation7], 0
    %s29 = scalar_lea.sflag [#allocation7], 1
    %30 = vsyncpa %s29, 0
    loop: start=0, step=1, limit=4
    $region2: #{tpu_custom_call.1} parent=1 // loop_pre_header
      _
    $region3: #{tpu_custom_call.1} parent=1 // loop_header
      %s32 = sphi 0, %s36
      %p33 = scmp.ge.s32.totalorder %s32, 4
      %s42 = sphi 0, %s44
      %s45 = sphi 0, %s42
      %s46 = sphi 0, %s45
      %s62 = sphi 0, %s46
      %s68 = sphi 0, %s70
      %s71 = sphi 0, %s68
      %s72 = sphi 0, %s71
      %s88 = sphi 0, %s72
      %s94 = sphi 0, %s96
      %s97 = sphi 0, %s94
      %s98 = sphi 0, %s97
      %s114 = sphi 0, %s98
      %s118 = sphi 0, %s118
      %s120 = sphi 0, %s118
      %s121 = sphi 0, %s120
      %s135 = sphi 0, %s121
      %s139 = sphi 0, %s139
      %s141 = sphi 0, %s139
      %s142 = sphi 0, %s141
      %s156 = sphi 0, %s142
      %s160 = sphi 0, %s160
      %s162 = sphi 0, %s160
      %s163 = sphi 0, %s162
      %s177 = sphi 0, %s163
      %s181 = sphi 0, %s181
      %s183 = sphi 0, %s181
      %s184 = sphi 0, %s183
      %s198 = sphi 0, %s184
      %s202 = sphi 0, %s202
      %s204 = sphi 0, %s202
      %s205 = sphi 0, %s204
      %s219 = sphi 0, %s205
      %s223 = sphi 0, %s223
      %s225 = sphi 0, %s223
      %s226 = sphi 0, %s225
      %s240 = sphi 0, %s226
      %s244 = sphi 0, %s244
      %s246 = sphi 0, %s244
      %s247 = sphi 0, %s246
      %s261 = sphi 0, %s247
      %s265 = sphi 0, %s265
      %s267 = sphi 0, %s265
      %s268 = sphi 0, %s267
      %s282 = sphi 0, %s268
      %s286 = sphi 0, %s286
      %s288 = sphi 0, %s286
      %s289 = sphi 0, %s288
      %s303 = sphi 0, %s289
      %s307 = sphi 0, %s307
      %s309 = sphi 0, %s307
      %s310 = sphi 0, %s309
      %s324 = sphi 0, %s310
      %s328 = sphi 0, %s328
      %s330 = sphi 0, %s328
      %s331 = sphi 0, %s330
      %s345 = sphi 0, %s331
      %s349 = sphi 0, %s349
      %s351 = sphi 0, %s349
      %s352 = sphi 0, %s351
      %s366 = sphi 0, %s352
      %s372 = sphi 0, %s374
      %s375 = sphi 0, %s372
      %s376 = sphi 0, %s375
      %s392 = sphi 0, %s376
      %s398 = sphi 0, %s400
      %s401 = sphi 0, %s398
      %s402 = sphi 0, %s401
      %s418 = sphi 0, %s402
    $region4: #{tpu_custom_call.1} parent=1 // loop_header_branch
      %35 = sbr.rel (%p33) target = $region8
    $region5: #{tpu_custom_call.1} parent=1 // loop_body
      %s37 = ssub.s32 %s32, 1
      %s38 = ssub.s32 %s32, 2
      %s39 = sadd.s32 %s32, 1
      %s40 = ssub.s32 %s32, %s39
      %p41 = scmp.eq.s32.totalorder %s40, 0
      %s43 = sadd.s32 %s42, 1
      %s44 = scalar_select %p41, %s42, %s43
      %p47 = pneg %p41
      %p48 = scmp.eq.s32.totalorder %s32, 1
      %p49 = por %p47, %p48
      %p50 = scmp.ne.s32.totalorder %s42, %s45
      %p51 = scmp.eq.s32.totalorder %s32, 0
      %p52 = por %p50, %p51
      %p53 = scmp.ne.s32.totalorder %s42, %s45
      %p54 = scmp.eq.s32.totalorder %s37, 1
      %p55 = por %p53, %p54
      %p56 = scmp.ne.s32.totalorder %s45, %s46
      %p57 = scmp.eq.s32.totalorder %s37, 0
      %p58 = por %p56, %p57
      %p59 = scmp.ne.s32.totalorder %s45, %s46
      %p60 = scmp.eq.s32.totalorder %s38, 1
      %p61 = por %p59, %p60
      %p63 = scmp.ne.s32.totalorder %s46, %s62
      %p64 = scmp.eq.s32.totalorder %s38, 0
      %p65 = por %p63, %p64
      %s66 = ssub.s32 %s32, %s39
      %p67 = scmp.eq.s32.totalorder %s66, 0
      %s69 = sadd.s32 %s68, 1
      %s70 = scalar_select %p67, %s68, %s69
      %p73 = pneg %p67
      %p74 = scmp.eq.s32.totalorder %s32, 1
      %p75 = por %p73, %p74
      %p76 = scmp.ne.s32.totalorder %s68, %s71
      %p77 = scmp.eq.s32.totalorder %s32, 0
      %p78 = por %p76, %p77
      %p79 = scmp.ne.s32.totalorder %s68, %s71
      %p80 = scmp.eq.s32.totalorder %s37, 1
      %p81 = por %p79, %p80
      %p82 = scmp.ne.s32.totalorder %s71, %s72
      %p83 = scmp.eq.s32.totalorder %s37, 0
      %p84 = por %p82, %p83
      %p85 = scmp.ne.s32.totalorder %s71, %s72
      %p86 = scmp.eq.s32.totalorder %s38, 1
      %p87 = por %p85, %p86
      %p89 = scmp.ne.s32.totalorder %s72, %s88
      %p90 = scmp.eq.s32.totalorder %s38, 0
      %p91 = por %p89, %p90
      %s92 = ssub.s32 %s32, %s39
      %p93 = scmp.eq.s32.totalorder %s92, 0
      %s95 = sadd.s32 %s94, 1
      %s96 = scalar_select %p93, %s94, %s95
      %p99 = pneg %p93
      %p100 = scmp.eq.s32.totalorder %s32, 1
      %p101 = por %p99, %p100
      %p102 = scmp.ne.s32.totalorder %s94, %s97
      %p103 = scmp.eq.s32.totalorder %s32, 0
      %p104 = por %p102, %p103
      %p105 = scmp.ne.s32.totalorder %s94, %s97
      %p106 = scmp.eq.s32.totalorder %s37, 1
      %p107 = por %p105, %p106
      %p108 = scmp.ne.s32.totalorder %s97, %s98
      %p109 = scmp.eq.s32.totalorder %s37, 0
      %p110 = por %p108, %p109
      %p111 = scmp.ne.s32.totalorder %s97, %s98
      %p112 = scmp.eq.s32.totalorder %s38, 1
      %p113 = por %p111, %p112
      %p115 = scmp.ne.s32.totalorder %s98, %s114
      %p116 = scmp.eq.s32.totalorder %s38, 0
      %p117 = por %p115, %p116
      %s119 = sadd.s32 %s118, 1
      %p122 = scmp.eq.s32.totalorder %s32, 1
      %p123 = scmp.ne.s32.totalorder %s118, %s120
      %p124 = scmp.eq.s32.totalorder %s32, 0
      %p125 = por %p123, %p124
      %p126 = scmp.ne.s32.totalorder %s118, %s120
      %p127 = scmp.eq.s32.totalorder %s37, 1
      %p128 = por %p126, %p127
      %p129 = scmp.ne.s32.totalorder %s120, %s121
      %p130 = scmp.eq.s32.totalorder %s37, 0
      %p131 = por %p129, %p130
      %p132 = scmp.ne.s32.totalorder %s120, %s121
      %p133 = scmp.eq.s32.totalorder %s38, 1
      %p134 = por %p132, %p133
      %p136 = scmp.ne.s32.totalorder %s121, %s135
      %p137 = scmp.eq.s32.totalorder %s38, 0
      %p138 = por %p136, %p137
      %s140 = sadd.s32 %s139, 1
      %p143 = scmp.eq.s32.totalorder %s32, 1
      %p144 = scmp.ne.s32.totalorder %s139, %s141
      %p145 = scmp.eq.s32.totalorder %s32, 0
      %p146 = por %p144, %p145
      %p147 = scmp.ne.s32.totalorder %s139, %s141
      %p148 = scmp.eq.s32.totalorder %s37, 1
      %p149 = por %p147, %p148
      %p150 = scmp.ne.s32.totalorder %s141, %s142
      %p151 = scmp.eq.s32.totalorder %s37, 0
      %p152 = por %p150, %p151
      %p153 = scmp.ne.s32.totalorder %s141, %s142
      %p154 = scmp.eq.s32.totalorder %s38, 1
      %p155 = por %p153, %p154
      %p157 = scmp.ne.s32.totalorder %s142, %s156
      %p158 = scmp.eq.s32.totalorder %s38, 0
      %p159 = por %p157, %p158
      %s161 = sadd.s32 %s160, 1
      %p164 = scmp.eq.s32.totalorder %s32, 1
      %p165 = scmp.ne.s32.totalorder %s160, %s162
      %p166 = scmp.eq.s32.totalorder %s32, 0
      %p167 = por %p165, %p166
      %p168 = scmp.ne.s32.totalorder %s160, %s162
      %p169 = scmp.eq.s32.totalorder %s37, 1
      %p170 = por %p168, %p169
      %p171 = scmp.ne.s32.totalorder %s162, %s163
      %p172 = scmp.eq.s32.totalorder %s37, 0
      %p173 = por %p171, %p172
      %p174 = scmp.ne.s32.totalorder %s162, %s163
      %p175 = scmp.eq.s32.totalorder %s38, 1
      %p176 = por %p174, %p175
      %p178 = scmp.ne.s32.totalorder %s163, %s177
      %p179 = scmp.eq.s32.totalorder %s38, 0
      %p180 = por %p178, %p179
      %s182 = sadd.s32 %s181, 1
      %p185 = scmp.eq.s32.totalorder %s32, 1
      %p186 = scmp.ne.s32.totalorder %s181, %s183
      %p187 = scmp.eq.s32.totalorder %s32, 0
      %p188 = por %p186, %p187
      %p189 = scmp.ne.s32.totalorder %s181, %s183
      %p190 = scmp.eq.s32.totalorder %s37, 1
      %p191 = por %p189, %p190
      %p192 = scmp.ne.s32.totalorder %s183, %s184
      %p193 = scmp.eq.s32.totalorder %s37, 0
      %p194 = por %p192, %p193
      %p195 = scmp.ne.s32.totalorder %s183, %s184
      %p196 = scmp.eq.s32.totalorder %s38, 1
      %p197 = por %p195, %p196
      %p199 = scmp.ne.s32.totalorder %s184, %s198
      %p200 = scmp.eq.s32.totalorder %s38, 0
      %p201 = por %p199, %p200
      %s203 = sadd.s32 %s202, 1
      %p206 = scmp.eq.s32.totalorder %s32, 1
      %p207 = scmp.ne.s32.totalorder %s202, %s204
      %p208 = scmp.eq.s32.totalorder %s32, 0
      %p209 = por %p207, %p208
      %p210 = scmp.ne.s32.totalorder %s202, %s204
      %p211 = scmp.eq.s32.totalorder %s37, 1
      %p212 = por %p210, %p211
      %p213 = scmp.ne.s32.totalorder %s204, %s205
      %p214 = scmp.eq.s32.totalorder %s37, 0
      %p215 = por %p213, %p214
      %p216 = scmp.ne.s32.totalorder %s204, %s205
      %p217 = scmp.eq.s32.totalorder %s38, 1
      %p218 = por %p216, %p217
      %p220 = scmp.ne.s32.totalorder %s205, %s219
      %p221 = scmp.eq.s32.totalorder %s38, 0
      %p222 = por %p220, %p221
      %s224 = sadd.s32 %s223, 1
      %p227 = scmp.eq.s32.totalorder %s32, 1
      %p228 = scmp.ne.s32.totalorder %s223, %s225
      %p229 = scmp.eq.s32.totalorder %s32, 0
      %p230 = por %p228, %p229
      %p231 = scmp.ne.s32.totalorder %s223, %s225
      %p232 = scmp.eq.s32.totalorder %s37, 1
      %p233 = por %p231, %p232
      %p234 = scmp.ne.s32.totalorder %s225, %s226
      %p235 = scmp.eq.s32.totalorder %s37, 0
      %p236 = por %p234, %p235
      %p237 = scmp.ne.s32.totalorder %s225, %s226
      %p238 = scmp.eq.s32.totalorder %s38, 1
      %p239 = por %p237, %p238
      %p241 = scmp.ne.s32.totalorder %s226, %s240
      %p242 = scmp.eq.s32.totalorder %s38, 0
      %p243 = por %p241, %p242
      %s245 = sadd.s32 %s244, 1
      %p248 = scmp.eq.s32.totalorder %s32, 1
      %p249 = scmp.ne.s32.totalorder %s244, %s246
      %p250 = scmp.eq.s32.totalorder %s32, 0
      %p251 = por %p249, %p250
      %p252 = scmp.ne.s32.totalorder %s244, %s246
      %p253 = scmp.eq.s32.totalorder %s37, 1
      %p254 = por %p252, %p253
      %p255 = scmp.ne.s32.totalorder %s246, %s247
      %p256 = scmp.eq.s32.totalorder %s37, 0
      %p257 = por %p255, %p256
      %p258 = scmp.ne.s32.totalorder %s246, %s247
      %p259 = scmp.eq.s32.totalorder %s38, 1
      %p260 = por %p258, %p259
      %p262 = scmp.ne.s32.totalorder %s247, %s261
      %p263 = scmp.eq.s32.totalorder %s38, 0
      %p264 = por %p262, %p263
      %s266 = sadd.s32 %s265, 1
      %p269 = scmp.eq.s32.totalorder %s32, 1
      %p270 = scmp.ne.s32.totalorder %s265, %s267
      %p271 = scmp.eq.s32.totalorder %s32, 0
      %p272 = por %p270, %p271
      %p273 = scmp.ne.s32.totalorder %s265, %s267
      %p274 = scmp.eq.s32.totalorder %s37, 1
      %p275 = por %p273, %p274
      %p276 = scmp.ne.s32.totalorder %s267, %s268
      %p277 = scmp.eq.s32.totalorder %s37, 0
      %p278 = por %p276, %p277
      %p279 = scmp.ne.s32.totalorder %s267, %s268
      %p280 = scmp.eq.s32.totalorder %s38, 1
      %p281 = por %p279, %p280
      %p283 = scmp.ne.s32.totalorder %s268, %s282
      %p284 = scmp.eq.s32.totalorder %s38, 0
      %p285 = por %p283, %p284
      %s287 = sadd.s32 %s286, 1
      %p290 = scmp.eq.s32.totalorder %s32, 1
      %p291 = scmp.ne.s32.totalorder %s286, %s288
      %p292 = scmp.eq.s32.totalorder %s32, 0
      %p293 = por %p291, %p292
      %p294 = scmp.ne.s32.totalorder %s286, %s288
      %p295 = scmp.eq.s32.totalorder %s37, 1
      %p296 = por %p294, %p295
      %p297 = scmp.ne.s32.totalorder %s288, %s289
      %p298 = scmp.eq.s32.totalorder %s37, 0
      %p299 = por %p297, %p298
      %p300 = scmp.ne.s32.totalorder %s288, %s289
      %p301 = scmp.eq.s32.totalorder %s38, 1
      %p302 = por %p300, %p301
      %p304 = scmp.ne.s32.totalorder %s289, %s303
      %p305 = scmp.eq.s32.totalorder %s38, 0
      %p306 = por %p304, %p305
      %s308 = sadd.s32 %s307, 1
      %p311 = scmp.eq.s32.totalorder %s32, 1
      %p312 = scmp.ne.s32.totalorder %s307, %s309
      %p313 = scmp.eq.s32.totalorder %s32, 0
      %p314 = por %p312, %p313
      %p315 = scmp.ne.s32.totalorder %s307, %s309
      %p316 = scmp.eq.s32.totalorder %s37, 1
      %p317 = por %p315, %p316
      %p318 = scmp.ne.s32.totalorder %s309, %s310
      %p319 = scmp.eq.s32.totalorder %s37, 0
      %p320 = por %p318, %p319
      %p321 = scmp.ne.s32.totalorder %s309, %s310
      %p322 = scmp.eq.s32.totalorder %s38, 1
      %p323 = por %p321, %p322
      %p325 = scmp.ne.s32.totalorder %s310, %s324
      %p326 = scmp.eq.s32.totalorder %s38, 0
      %p327 = por %p325, %p326
      %s329 = sadd.s32 %s328, 1
      %p332 = scmp.eq.s32.totalorder %s32, 1
      %p333 = scmp.ne.s32.totalorder %s328, %s330
      %p334 = scmp.eq.s32.totalorder %s32, 0
      %p335 = por %p333, %p334
      %p336 = scmp.ne.s32.totalorder %s328, %s330
      %p337 = scmp.eq.s32.totalorder %s37, 1
      %p338 = por %p336, %p337
      %p339 = scmp.ne.s32.totalorder %s330, %s331
      %p340 = scmp.eq.s32.totalorder %s37, 0
      %p341 = por %p339, %p340
      %p342 = scmp.ne.s32.totalorder %s330, %s331
      %p343 = scmp.eq.s32.totalorder %s38, 1
      %p344 = por %p342, %p343
      %p346 = scmp.ne.s32.totalorder %s331, %s345
      %p347 = scmp.eq.s32.totalorder %s38, 0
      %p348 = por %p346, %p347
      %s350 = sadd.s32 %s349, 1
      %p353 = scmp.eq.s32.totalorder %s32, 1
      %p354 = scmp.ne.s32.totalorder %s349, %s351
      %p355 = scmp.eq.s32.totalorder %s32, 0
      %p356 = por %p354, %p355
      %p357 = scmp.ne.s32.totalorder %s349, %s351
      %p358 = scmp.eq.s32.totalorder %s37, 1
      %p359 = por %p357, %p358
      %p360 = scmp.ne.s32.totalorder %s351, %s352
      %p361 = scmp.eq.s32.totalorder %s37, 0
      %p362 = por %p360, %p361
      %p363 = scmp.ne.s32.totalorder %s351, %s352
      %p364 = scmp.eq.s32.totalorder %s38, 1
      %p365 = por %p363, %p364
      %p367 = scmp.ne.s32.totalorder %s352, %s366
      %p368 = scmp.eq.s32.totalorder %s38, 0
      %p369 = por %p367, %p368
      %s370 = ssub.s32 %s32, %s39
      %p371 = scmp.eq.s32.totalorder %s370, 0
      %s373 = sadd.s32 %s372, 1
      %s374 = scalar_select %p371, %s372, %s373
      %p377 = pneg %p371
      %p378 = scmp.eq.s32.totalorder %s32, 1
      %p379 = por %p377, %p378
      %p380 = scmp.ne.s32.totalorder %s372, %s375
      %p381 = scmp.eq.s32.totalorder %s32, 0
      %p382 = por %p380, %p381
      %p383 = scmp.ne.s32.totalorder %s372, %s375
      %p384 = scmp.eq.s32.totalorder %s37, 1
      %p385 = por %p383, %p384
      %p386 = scmp.ne.s32.totalorder %s375, %s376
      %p387 = scmp.eq.s32.totalorder %s37, 0
      %p388 = por %p386, %p387
      %p389 = scmp.ne.s32.totalorder %s375, %s376
      %p390 = scmp.eq.s32.totalorder %s38, 1
      %p391 = por %p389, %p390
      %p393 = scmp.ne.s32.totalorder %s376, %s392
      %p394 = scmp.eq.s32.totalorder %s38, 0
      %p395 = por %p393, %p394
      %s396 = ssub.s32 %s32, %s39
      %p397 = scmp.eq.s32.totalorder %s396, 0
      %s399 = sadd.s32 %s398, 1
      %s400 = scalar_select %p397, %s398, %s399
      %p403 = pneg %p397
      %p404 = scmp.eq.s32.totalorder %s32, 1
      %p405 = por %p403, %p404
      %p406 = scmp.ne.s32.totalorder %s398, %s401
      %p407 = scmp.eq.s32.totalorder %s32, 0
      %p408 = por %p406, %p407
      %p409 = scmp.ne.s32.totalorder %s398, %s401
      %p410 = scmp.eq.s32.totalorder %s37, 1
      %p411 = por %p409, %p410
      %p412 = scmp.ne.s32.totalorder %s401, %s402
      %p413 = scmp.eq.s32.totalorder %s37, 0
      %p414 = por %p412, %p413
      %p415 = scmp.ne.s32.totalorder %s401, %s402
      %p416 = scmp.eq.s32.totalorder %s38, 1
      %p417 = por %p415, %p416
      %p419 = scmp.ne.s32.totalorder %s402, %s418
      %p420 = scmp.eq.s32.totalorder %s38, 0
      %p421 = por %p419, %p420
      %p422 = scmp.le.s32.totalorder 1, %s32
      %p423 = scmp.lt.s32.totalorder %s32, 3
      %p424 = pnand %p422, %p423
      %p425 = pneg %p424
      // Predicated region
      $region9: #{tpu_custom_call.1} parent=5 // pred_check
        _
      $region10: #{tpu_custom_call.1} parent=5 // pred_check_branch
        %427 = sbr.rel (%p424) target = $region12
      $region11: #{tpu_custom_call.1} parent=5 // pred_region
        %s428 = ssub.s32 %s32, 1
        // Predicated region
        $region13: #{tpu_custom_call.1} parent=11 // pred_check
          %p429 = pneg %p131
        $region14: #{tpu_custom_call.1} parent=11 // pred_check_branch
          %431 = sbr.rel (%p429) target = $region16
        $region15: #{tpu_custom_call.1} parent=11 // pred_region
          _
        $region16: #{tpu_custom_call.1} parent=11 // pred_fallthru
          _
        // Predicated region
        $region17: #{tpu_custom_call.1} parent=11 // pred_check
          %p432 = pneg %p152
        $region18: #{tpu_custom_call.1} parent=11 // pred_check_branch
          %434 = sbr.rel (%p432) target = $region20
        $region19: #{tpu_custom_call.1} parent=11 // pred_region
          _
        $region20: #{tpu_custom_call.1} parent=11 // pred_fallthru
          _
        // Predicated region
        $region21: #{tpu_custom_call.1} parent=11 // pred_check
          %p435 = pneg %p173
        $region22: #{tpu_custom_call.1} parent=11 // pred_check_branch
          %437 = sbr.rel (%p435) target = $region24
        $region23: #{tpu_custom_call.1} parent=11 // pred_region
          _
        $region24: #{tpu_custom_call.1} parent=11 // pred_fallthru
          _
        // Predicated region
        $region25: #{tpu_custom_call.1} parent=11 // pred_check
          %p438 = pneg %p194
        $region26: #{tpu_custom_call.1} parent=11 // pred_check_branch
          %440 = sbr.rel (%p438) target = $region28
        $region27: #{tpu_custom_call.1} parent=11 // pred_region
          _
        $region28: #{tpu_custom_call.1} parent=11 // pred_fallthru
          _
        // Predicated region
        $region29: #{tpu_custom_call.1} parent=11 // pred_check
          %p441 = pneg %p215
        $region30: #{tpu_custom_call.1} parent=11 // pred_check_branch
          %443 = sbr.rel (%p441) target = $region32
        $region31: #{tpu_custom_call.1} parent=11 // pred_region
          _
        $region32: #{tpu_custom_call.1} parent=11 // pred_fallthru
          _
        // Predicated region
        $region33: #{tpu_custom_call.1} parent=11 // pred_check
          %p444 = pneg %p236
        $region34: #{tpu_custom_call.1} parent=11 // pred_check_branch
          %446 = sbr.rel (%p444) target = $region36
        $region35: #{tpu_custom_call.1} parent=11 // pred_region
          _
        $region36: #{tpu_custom_call.1} parent=11 // pred_fallthru
          _
        // Predicated region
        $region37: #{tpu_custom_call.1} parent=11 // pred_check
          %p447 = pneg %p257
        $region38: #{tpu_custom_call.1} parent=11 // pred_check_branch
          %449 = sbr.rel (%p447) target = $region40
        $region39: #{tpu_custom_call.1} parent=11 // pred_region
          _
        $region40: #{tpu_custom_call.1} parent=11 // pred_fallthru
          _
        // Predicated region
        $region41: #{tpu_custom_call.1} parent=11 // pred_check
          %p450 = pneg %p278
        $region42: #{tpu_custom_call.1} parent=11 // pred_check_branch
          %452 = sbr.rel (%p450) target = $region44
        $region43: #{tpu_custom_call.1} parent=11 // pred_region
          _
        $region44: #{tpu_custom_call.1} parent=11 // pred_fallthru
          _
        // Predicated region
        $region45: #{tpu_custom_call.1} parent=11 // pred_check
          %p453 = pneg %p299
        $region46: #{tpu_custom_call.1} parent=11 // pred_check_branch
          %455 = sbr.rel (%p453) target = $region48
        $region47: #{tpu_custom_call.1} parent=11 // pred_region
          _
        $region48: #{tpu_custom_call.1} parent=11 // pred_fallthru
          _
        // Predicated region
        $region49: #{tpu_custom_call.1} parent=11 // pred_check
          %p456 = pneg %p320
        $region50: #{tpu_custom_call.1} parent=11 // pred_check_branch
          %458 = sbr.rel (%p456) target = $region52
        $region51: #{tpu_custom_call.1} parent=11 // pred_region
          _
        $region52: #{tpu_custom_call.1} parent=11 // pred_fallthru
          _
        // Predicated region
        $region53: #{tpu_custom_call.1} parent=11 // pred_check
          %p459 = pneg %p341
        $region54: #{tpu_custom_call.1} parent=11 // pred_check_branch
          %461 = sbr.rel (%p459) target = $region56
        $region55: #{tpu_custom_call.1} parent=11 // pred_region
          _
        $region56: #{tpu_custom_call.1} parent=11 // pred_fallthru
          _
        // Predicated region
        $region57: #{tpu_custom_call.1} parent=11 // pred_check
          %p462 = pneg %p362
        $region58: #{tpu_custom_call.1} parent=11 // pred_check_branch
          %464 = sbr.rel (%p462) target = $region60
        $region59: #{tpu_custom_call.1} parent=11 // pred_region
          _
        $region60: #{tpu_custom_call.1} parent=11 // pred_fallthru
          _
      $region12: #{tpu_custom_call.1} parent=5 // pred_fallthru
        _
      %p465 = scmp.lt.s32.totalorder %s32, 2
      // Predicated region
      $region61: #{tpu_custom_call.1} parent=5 // pred_check
        %p466 = pneg %p465
      $region62: #{tpu_custom_call.1} parent=5 // pred_check_branch
        %468 = sbr.rel (%p466) target = $region64
      $region63: #{tpu_custom_call.1} parent=5 // pred_region
        // Predicated region
        $region65: #{tpu_custom_call.1} parent=63 // pred_check
          %p469 = pneg %p52
        $region66: #{tpu_custom_call.1} parent=63 // pred_check_branch
          %471 = sbr.rel (%p469) target = $region68
        $region67: #{tpu_custom_call.1} parent=63 // pred_region
          %p472 = scmp.lt.s32.totalorder %s32, 1
          %s473 = scalar_select %p472, %s32, 1
          %s474 = smul.addr %s473, 8
          %s475 = scalar_lea.vmem %s0, %s474
        $region68: #{tpu_custom_call.1} parent=63 // pred_fallthru
          _
        // Predicated region
        $region69: #{tpu_custom_call.1} parent=63 // pred_check
          %p476 = pneg %p78
        $region70: #{tpu_custom_call.1} parent=63 // pred_check_branch
          %478 = sbr.rel (%p476) target = $region72
        $region71: #{tpu_custom_call.1} parent=63 // pred_region
          %p479 = scmp.lt.s32.totalorder %s32, 1
          %s480 = scalar_select %p479, %s32, 1
          %s481 = smul.addr %s480, 8
          %s482 = scalar_lea.vmem %s1, %s481
        $region72: #{tpu_custom_call.1} parent=63 // pred_fallthru
          _
        // Predicated region
        $region73: #{tpu_custom_call.1} parent=63 // pred_check
          %p483 = pneg %p104
        $region74: #{tpu_custom_call.1} parent=63 // pred_check_branch
          %485 = sbr.rel (%p483) target = $region76
        $region75: #{tpu_custom_call.1} parent=63 // pred_region
          %s486 = sand.u32 %s94, 1
          %s487 = scalar_lea.sflag [#allocation3], %s486
          %s488 = sand.u32 %s94, 1
          %s489 = scalar_lea.vmem [#allocation2], %s488
          %s491 = ssub.s32 16, 16
          %492 = vsyncadd %s487, %s491
          %s493 = smul.addr %s32, 16
          %s494 = scalar_lea.hbm %s2, %s493
          %s496 = sshll.u32 %s489, 4
          %s497 = int_to_ptr.vmem [resolvable:$true] %s496
          %499 = dma.hbm_to_vmem [thread:$0]  %s494, 16, %s497, %s487
        $region76: #{tpu_custom_call.1} parent=63 // pred_fallthru
          _
      $region64: #{tpu_custom_call.1} parent=5 // pred_fallthru
        _
      %p500 = scmp.le.s32.totalorder 1, %s32
      %p501 = scmp.lt.s32.totalorder %s32, 3
      %p502 = pnand %p500, %p501
      %p503 = pneg %p502
      // Predicated region
      $region77: #{tpu_custom_call.1} parent=5 // pred_check
        _
      $region78: #{tpu_custom_call.1} parent=5 // pred_check_branch
        %505 = sbr.rel (%p502) target = $region80
      $region79: #{tpu_custom_call.1} parent=5 // pred_region
        %s506 = ssub.s32 %s32, 1
        %s507 = sand.u32 %s97, 1
        %s508 = scalar_lea.sflag [#allocation3], %s507
        %s509 = sand.u32 %s97, 1
        %s510 = scalar_lea.vmem [#allocation2], %s509
        // Predicated region
        $region81: #{tpu_custom_call.1} parent=79 // pred_check
          %p511 = pneg %p110
        $region82: #{tpu_custom_call.1} parent=79 // pred_check_branch
          %513 = sbr.rel (%p511) target = $region84
        $region83: #{tpu_custom_call.1} parent=79 // pred_region
          %514 = dma.done %s508, 16
        $region84: #{tpu_custom_call.1} parent=79 // pred_fallthru
          _
        %p515 = scmp.lt.s32.totalorder %s37, 1
        %s516 = scalar_select %p515, %s37, 1
        %s517 = smul.addr %s516, 8
        %s518 = scalar_lea.vmem %s0, %s517
        %p519 = pneg %p58
        %p520 = pneg %p55
        %p521 = scmp.lt.s32.totalorder %s37, 1
        %s522 = scalar_select %p521, %s37, 1
        %s523 = smul.addr %s522, 8
        %s524 = scalar_lea.vmem %s1, %s523
        %p525 = pneg %p84
        %p526 = pneg %p81
        %s527 = sand.u32 %s97, 1
        %s528 = scalar_lea.sflag [#allocation3], %s527
        %s529 = sand.u32 %s97, 1
        %s530 = scalar_lea.vmem [#allocation2], %s529
        %p531 = pneg %p110
        %p532 = pneg %p107
        %p533 = pneg %p131
        %p534 = pneg %p128
        %p535 = pneg %p152
        %p536 = pneg %p149
        %p537 = pneg %p173
        %p538 = pneg %p170
        %p539 = pneg %p194
        %p540 = pneg %p191
        %p541 = pneg %p215
        %p542 = pneg %p212
        %p543 = pneg %p236
        %p544 = pneg %p233
        %p545 = pneg %p257
        %p546 = pneg %p254
        %p547 = pneg %p278
        %p548 = pneg %p275
        %p549 = pneg %p299
        %p550 = pneg %p296
        %p551 = pneg %p320
        %p552 = pneg %p317
        %p553 = pneg %p341
        %p554 = pneg %p338
        %p555 = pneg %p362
        %p556 = pneg %p359
        %p557 = pneg %p388
        %p558 = pneg %p385
        %s559 = sand.u32 %s375, 1
        %s560 = scalar_lea.sflag [#allocation4], %s559
        %s561 = sand.u32 %s375, 1
        %s562 = smul.addr %s561, 8
        %s563 = scalar_lea.vmem [#allocation5], %s562
        %p564 = pneg %p414
        %p565 = pneg %p411
        %s566 = sand.u32 %s401, 1
        %s567 = scalar_lea.sflag [#allocation7], %s566
        %s568 = sand.u32 %s401, 1
        %s569 = smul.addr %s568, 4
        %s570 = scalar_lea.vmem [#allocation6], %s569
        %p571 = scmp.lt.s32.totalorder %s37, 1
        %s572 = scalar_select %p571, %s37, 1
        %s573 = smul.addr %s572, 8
        %s574 = scalar_lea.vmem %s0, %s573
        %p575 = scmp.lt.s32.totalorder %s37, 1
        %s576 = scalar_select %p575, %s37, 1
        %s577 = smul.addr %s576, 8
        %s578 = scalar_lea.vmem %s1, %s577
        %v580 = vld [vmem:[%s574] sm:$0xff]
        %v581 = vpack.c.bf16 %v580, %v580
        %v582 = vld [vmem:[%s578] sm:$0xff]
        %v583 = vld [vmem:[%s510] sm:$0x1]
        %v584 = vmul.f32 %v583, -1e+30
        %v585 = vld [vmem:[%s3] sm:$0xf]
        %v586 = vld [vmem:[%s3 + $0x4] sm:$0xf]
        %v587 = vld [vmem:[%s3 + $0x8] sm:$0xf]
        %v588 = vld [vmem:[%s3 + $0xc] sm:$0xf]
        %v589 = vld [vmem:[%s4] sm:$0x1]
        %v591 = vlaneseq
        %v592 = vshrl.u32 %v591, 7
        %v593 = vsub.s32 0, %v592
        %v594 = vrot.slane %v589, %v593
        %v600 = vunpack.c.l.b16 %v585
        %v601 = vunpack.c.l.b16 %v586
        %v602 = vunpack.c.l.b16 %v587
        %v603 = vunpack.c.l.b16 %v588
        %v604 = vpack.c.b16 %v601, %v600
        %v605 = vpack.c.b16 %v603, %v602
        %vm608 = vcmask 261120
        %v610 = vsel %vm608, %v581, 0
        %612 = vmatprep.subr.bf16.mxu0 0
        %613 = vmatpush1.bf16.msra.mxu0 %v604
        %614 = vmatprep.subr.bf16.mxu0 0
        %615 = vmatpush1.bf16.msra.mxu0 %v605
        %616 = vmatprep.subr.bf16.mxu0 0
        %617 = vmatpush1.bf16.msra.mxu0 0
        %618 = vmatprep.subr.bf16.mxu0 0
        %619 = vmatpush1.bf16.msra.mxu0 0
        %620 = vmatprep.subr.bf16.mxu0 0
        %621 = vmatpush1.bf16.msra.mxu0 0
        %622 = vmatprep.subr.bf16.mxu0 0
        %623 = vmatpush1.bf16.msra.mxu0 0
        %624 = vmatprep.subr.bf16.mxu0 0
        %625 = vmatpush1.bf16.msra.mxu0 0
        %626 = vmatprep.subr.bf16.mxu0 0
        %627 = vmatpush1.bf16.msra.mxu0 0
        %628 = vmatprep.subr.bf16.mxu0 0
        %629 = vmatpush1.bf16.msra.mxu0 0
        %630 = vmatprep.subr.bf16.mxu0 0
        %631 = vmatpush1.bf16.msra.mxu0 0
        %632 = vmatprep.subr.bf16.mxu0 0
        %633 = vmatpush1.bf16.msra.mxu0 0
        %634 = vmatprep.subr.bf16.mxu0 0
        %635 = vmatpush1.bf16.msra.mxu0 0
        %636 = vmatprep.subr.bf16.mxu0 0
        %637 = vmatpush1.bf16.msra.mxu0 0
        %638 = vmatprep.subr.bf16.mxu0 0
        %639 = vmatpush1.bf16.msra.mxu0 0
        %640 = vmatprep.subr.bf16.mxu0 0
        %641 = vmatpush1.bf16.msra.mxu0 0
        %642 = vmatprep.subr.bf16.mxu0 0
        %643 = vmatpush1.bf16.msra.mxu0 0
        %644 = vmatprep.mubr.bf16.mxu0 0
        %645 = vmatmul.mubr.bf16.gmra.mrb[0].mxu0 %v610
        %v646 = vpop.f32.mrb[0].mxu0
        %v647 = vadd.f32 %v594, %v646
        %v648 = vpop.f32.mrb[0].mxu0
        %v649 = vpop.f32.mrb[0].mxu0
        %v650 = vpop.f32.mrb[0].mxu0
        %651 = vdwg.mxu0
        %v652 = vpack.c.bf16 %v647, %v647
        %654 = vrot.lane.b32.xlu0 %v652, 96
        %v655 = vpop.permute.xlu0 %654
        %vm656 = vcmask 64512
        %v658 = vsel %vm656, %v652, 0
        %v661 = vsel %vm656, %v655, 0
        %663 = vmatprep.subr.bf16.mxu0 0
        %664 = vmatpush1.bf16.xpose.msra.mxu0 %v661
        %665 = vmatprep.subr.bf16.mxu0 0
        %666 = vmatpush1.bf16.xpose.msra.mxu0 0
        %667 = vmatprep.subr.bf16.mxu0 0
        %668 = vmatpush1.bf16.xpose.msra.mxu0 0
        %669 = vmatprep.subr.bf16.mxu0 0
        %670 = vmatpush1.bf16.xpose.msra.mxu0 0
        %671 = vmatprep.subr.bf16.mxu0 0
        %672 = vmatpush1.bf16.xpose.msra.mxu0 0
        %673 = vmatprep.subr.bf16.mxu0 0
        %674 = vmatpush1.bf16.xpose.msra.mxu0 0
        %675 = vmatprep.subr.bf16.mxu0 0
        %676 = vmatpush1.bf16.xpose.msra.mxu0 0
        %677 = vmatprep.subr.bf16.mxu0 0
        %678 = vmatpush1.bf16.xpose.msra.mxu0 0
        %679 = vmatprep.subr.bf16.mxu0 0
        %680 = vmatpush1.bf16.xpose.msra.mxu0 0
        %681 = vmatprep.subr.bf16.mxu0 0
        %682 = vmatpush1.bf16.xpose.msra.mxu0 0
        %683 = vmatprep.subr.bf16.mxu0 0
        %684 = vmatpush1.bf16.xpose.msra.mxu0 0
        %685 = vmatprep.subr.bf16.mxu0 0
        %686 = vmatpush1.bf16.xpose.msra.mxu0 0
        %687 = vmatprep.subr.bf16.mxu0 0
        %688 = vmatpush1.bf16.xpose.msra.mxu0 0
        %689 = vmatprep.subr.bf16.mxu0 0
        %690 = vmatpush1.bf16.xpose.msra.mxu0 0
        %691 = vmatprep.subr.bf16.mxu0 0
        %692 = vmatpush1.bf16.xpose.msra.mxu0 0
        %693 = vmatprep.subr.bf16.mxu0 0
        %694 = vmatpush1.bf16.xpose.msra.mxu0 0
        %695 = vmatprep.mubr.bf16.mxu0 0
        %696 = vmatmul.mubr.bf16.gmra.mrb[0].mxu0 %v658
        %v697 = vpop.f32.mrb[0].mxu0
        %v698 = vadd.f32 0.0, %v697
        %v699 = vpop.f32.mrb[0].mxu0
        %v700 = vpop.f32.mrb[0].mxu0
        %v701 = vpop.f32.mrb[0].mxu0
        %702 = vdwg.mxu0
        %v703 = vmul.f32 %v698, 0.35355338
        %v705 = vlaneseq
        %v706 = vshrl.u32 %v705, 7
        %v707 = vsub.s32 0, %v706
        %v708 = vrot.slane %v584, %v707
        %v710 = vadd.f32 %v703, %v708
        %v711 = vsel %vm656, %v710, -inf
        %712 = vmax.xlane.f32.xlu0 %v711
        %v713 = vpop.xlane.xlu0 %712
        %v714 = vsub.f32 %v710, %v713
        %v715 = vmul.f32 %v714, 1.442695
        %v716 = vpow.pop %v715
        %v717 = vsel %vm656, %v716, 0.0
        %718 = vadd.xlane.f32.xlu0 %v717
        %v719 = vpop.xlane.xlu0 %718
        %v720 = vrcp.pop %v719
        %v721 = vmul.f32 %v716, %v720
        %v722 = vpack.c.bf16 %v721, %v721
        %723 = vrot.lane.b32.xlu0 %v652, 64
        %v724 = vpop.permute.xlu0 %723
        %v726 = vsel %vm656, %v722, 0
        %vm728 = vcmask 1043456
        %v730 = vsel %vm728, %v724, 0
        %732 = vmatprep.subr.bf16.mxu0 0
        %733 = vmatpush1.bf16.msra.mxu0 %v730
        %734 = vmatprep.subr.bf16.mxu0 0
        %735 = vmatpush1.bf16.msra.mxu0 0
        %736 = vmatprep.subr.bf16.mxu0 0
        %737 = vmatpush1.bf16.msra.mxu0 0
        %738 = vmatprep.subr.bf16.mxu0 0
        %739 = vmatpush1.bf16.msra.mxu0 0
        %740 = vmatprep.subr.bf16.mxu0 0
        %741 = vmatpush1.bf16.msra.mxu0 0
        %742 = vmatprep.subr.bf16.mxu0 0
        %743 = vmatpush1.bf16.msra.mxu0 0
        %744 = vmatprep.subr.bf16.mxu0 0
        %745 = vmatpush1.bf16.msra.mxu0 0
        %746 = vmatprep.subr.bf16.mxu0 0
        %747 = vmatpush1.bf16.msra.mxu0 0
        %748 = vmatprep.subr.bf16.mxu0 0
        %749 = vmatpush1.bf16.msra.mxu0 0
        %750 = vmatprep.subr.bf16.mxu0 0
        %751 = vmatpush1.bf16.msra.mxu0 0
        %752 = vmatprep.subr.bf16.mxu0 0
        %753 = vmatpush1.bf16.msra.mxu0 0
        %754 = vmatprep.subr.bf16.mxu0 0
        %755 = vmatpush1.bf16.msra.mxu0 0
        %756 = vmatprep.subr.bf16.mxu0 0
        %757 = vmatpush1.bf16.msra.mxu0 0
        %758 = vmatprep.subr.bf16.mxu0 0
        %759 = vmatpush1.bf16.msra.mxu0 0
        %760 = vmatprep.subr.bf16.mxu0 0
        %761 = vmatpush1.bf16.msra.mxu0 0
        %762 = vmatprep.subr.bf16.mxu0 0
        %763 = vmatpush1.bf16.msra.mxu0 0
        %764 = vmatprep.mubr.bf16.mxu0 0
        %765 = vmatmul.mubr.bf16.gmra.mrb[0].mxu0 %v726
        %v766 = vpop.f32.mrb[0].mxu0
        %v767 = vadd.f32 0.0, %v766
        %v768 = vpop.f32.mrb[0].mxu0
        %v769 = vpop.f32.mrb[0].mxu0
        %v770 = vpop.f32.mrb[0].mxu0
        %771 = vdwg.mxu0
        %772 = vrot.lane.b32.xlu0 %v652, 120
        %v773 = vpop.permute.xlu0 %772
        %774 = vrot.lane.b32.xlu0 %v652, 88
        %v775 = vpop.permute.xlu0 %774
        %v777 = vsel %vm656, %v773, 0
        %v780 = vsel %vm656, %v775, 0
        %782 = vmatprep.subr.bf16.mxu0 0
        %783 = vmatpush1.bf16.xpose.msra.mxu0 %v780
        %784 = vmatprep.subr.bf16.mxu0 0
        %785 = vmatpush1.bf16.xpose.msra.mxu0 0
        %786 = vmatprep.subr.bf16.mxu0 0
        %787 = vmatpush1.bf16.xpose.msra.mxu0 0
        %788 = vmatprep.subr.bf16.mxu0 0
        %789 = vmatpush1.bf16.xpose.msra.mxu0 0
        %790 = vmatprep.subr.bf16.mxu0 0
        %791 = vmatpush1.bf16.xpose.msra.mxu0 0
        %792 = vmatprep.subr.bf16.mxu0 0
        %793 = vmatpush1.bf16.xpose.msra.mxu0 0
        %794 = vmatprep.subr.bf16.mxu0 0
        %795 = vmatpush1.bf16.xpose.msra.mxu0 0
        %796 = vmatprep.subr.bf16.mxu0 0
        %797 = vmatpush1.bf16.xpose.msra.mxu0 0
        %798 = vmatprep.subr.bf16.mxu0 0
        %799 = vmatpush1.bf16.xpose.msra.mxu0 0
        %800 = vmatprep.subr.bf16.mxu0 0
        %801 = vmatpush1.bf16.xpose.msra.mxu0 0
        %802 = vmatprep.subr.bf16.mxu0 0
        %803 = vmatpush1.bf16.xpose.msra.mxu0 0
        %804 = vmatprep.subr.bf16.mxu0 0
        %805 = vmatpush1.bf16.xpose.msra.mxu0 0
        %806 = vmatprep.subr.bf16.mxu0 0
        %807 = vmatpush1.bf16.xpose.msra.mxu0 0
        %808 = vmatprep.subr.bf16.mxu0 0
        %809 = vmatpush1.bf16.xpose.msra.mxu0 0
        %810 = vmatprep.subr.bf16.mxu0 0
        %811 = vmatpush1.bf16.xpose.msra.mxu0 0
        %812 = vmatprep.subr.bf16.mxu0 0
        %813 = vmatpush1.bf16.xpose.msra.mxu0 0
        %814 = vmatprep.mubr.bf16.mxu0 0
        %815 = vmatmul.mubr.bf16.gmra.mrb[0].mxu0 %v777
        %v816 = vpop.f32.mrb[0].mxu0
        %v817 = vadd.f32 0.0, %v816
        %v818 = vpop.f32.mrb[0].mxu0
        %v819 = vpop.f32.mrb[0].mxu0
        %v820 = vpop.f32.mrb[0].mxu0
        %821 = vdwg.mxu0
        %v822 = vmul.f32 %v817, 0.35355338
        %v823 = vadd.f32 %v822, %v708
        %v824 = vsel %vm656, %v823, -inf
        %825 = vmax.xlane.f32.xlu0 %v824
        %v826 = vpop.xlane.xlu0 %825
        %v827 = vsub.f32 %v823, %v826
        %v828 = vmul.f32 %v827, 1.442695
        %v829 = vpow.pop %v828
        %v830 = vsel %vm656, %v829, 0.0
        %831 = vadd.xlane.f32.xlu0 %v830
        %v832 = vpop.xlane.xlu0 %831
        %v833 = vrcp.pop %v832
        %v834 = vmul.f32 %v829, %v833
        %v835 = vpack.c.bf16 %v834, %v834
        %836 = vrot.lane.b32.xlu0 %v652, 56
        %v837 = vpop.permute.xlu0 %836
        %v839 = vsel %vm656, %v835, 0
        %v842 = vsel %vm728, %v837, 0
        %844 = vmatprep.subr.bf16.mxu0 0
        %845 = vmatpush1.bf16.msra.mxu0 %v842
        %846 = vmatprep.subr.bf16.mxu0 0
        %847 = vmatpush1.bf16.msra.mxu0 0
        %848 = vmatprep.subr.bf16.mxu0 0
        %849 = vmatpush1.bf16.msra.mxu0 0
        %850 = vmatprep.subr.bf16.mxu0 0
        %851 = vmatpush1.bf16.msra.mxu0 0
        %852 = vmatprep.subr.bf16.mxu0 0
        %853 = vmatpush1.bf16.msra.mxu0 0
        %854 = vmatprep.subr.bf16.mxu0 0
        %855 = vmatpush1.bf16.msra.mxu0 0
        %856 = vmatprep.subr.bf16.mxu0 0
        %857 = vmatpush1.bf16.msra.mxu0 0
        %858 = vmatprep.subr.bf16.mxu0 0
        %859 = vmatpush1.bf16.msra.mxu0 0
        %860 = vmatprep.subr.bf16.mxu0 0
        %861 = vmatpush1.bf16.msra.mxu0 0
        %862 = vmatprep.subr.bf16.mxu0 0
        %863 = vmatpush1.bf16.msra.mxu0 0
        %864 = vmatprep.subr.bf16.mxu0 0
        %865 = vmatpush1.bf16.msra.mxu0 0
        %866 = vmatprep.subr.bf16.mxu0 0
        %867 = vmatpush1.bf16.msra.mxu0 0
        %868 = vmatprep.subr.bf16.mxu0 0
        %869 = vmatpush1.bf16.msra.mxu0 0
        %870 = vmatprep.subr.bf16.mxu0 0
        %871 = vmatpush1.bf16.msra.mxu0 0
        %872 = vmatprep.subr.bf16.mxu0 0
        %873 = vmatpush1.bf16.msra.mxu0 0
        %874 = vmatprep.subr.bf16.mxu0 0
        %875 = vmatpush1.bf16.msra.mxu0 0
        %876 = vmatprep.mubr.bf16.mxu0 0
        %877 = vmatmul.mubr.bf16.gmra.mrb[0].mxu0 %v839
        %v878 = vpop.f32.mrb[0].mxu0
        %v879 = vadd.f32 0.0, %v878
        %v880 = vpop.f32.mrb[0].mxu0
        %v881 = vpop.f32.mrb[0].mxu0
        %v882 = vpop.f32.mrb[0].mxu0
        %883 = vdwg.mxu0
        %884 = vrot.lane.b32.xlu0 %v652, 112
        %v885 = vpop.permute.xlu0 %884
        %886 = vrot.lane.b32.xlu0 %v652, 80
        %v887 = vpop.permute.xlu0 %886
        %v889 = vsel %vm656, %v885, 0
        %v892 = vsel %vm656, %v887, 0
        %894 = vmatprep.subr.bf16.mxu0 0
        %895 = vmatpush1.bf16.xpose.msra.mxu0 %v892
        %896 = vmatprep.subr.bf16.mxu0 0
        %897 = vmatpush1.bf16.xpose.msra.mxu0 0
        %898 = vmatprep.subr.bf16.mxu0 0
        %899 = vmatpush1.bf16.xpose.msra.mxu0 0
        %900 = vmatprep.subr.bf16.mxu0 0
        %901 = vmatpush1.bf16.xpose.msra.mxu0 0
        %902 = vmatprep.subr.bf16.mxu0 0
        %903 = vmatpush1.bf16.xpose.msra.mxu0 0
        %904 = vmatprep.subr.bf16.mxu0 0
        %905 = vmatpush1.bf16.xpose.msra.mxu0 0
        %906 = vmatprep.subr.bf16.mxu0 0
        %907 = vmatpush1.bf16.xpose.msra.mxu0 0
        %908 = vmatprep.subr.bf16.mxu0 0
        %909 = vmatpush1.bf16.xpose.msra.mxu0 0
        %910 = vmatprep.subr.bf16.mxu0 0
        %911 = vmatpush1.bf16.xpose.msra.mxu0 0
        %912 = vmatprep.subr.bf16.mxu0 0
        %913 = vmatpush1.bf16.xpose.msra.mxu0 0
        %914 = vmatprep.subr.bf16.mxu0 0
        %915 = vmatpush1.bf16.xpose.msra.mxu0 0
        %916 = vmatprep.subr.bf16.mxu0 0
        %917 = vmatpush1.bf16.xpose.msra.mxu0 0
        %918 = vmatprep.subr.bf16.mxu0 0
        %919 = vmatpush1.bf16.xpose.msra.mxu0 0
        %920 = vmatprep.subr.bf16.mxu0 0
        %921 = vmatpush1.bf16.xpose.msra.mxu0 0
        %922 = vmatprep.subr.bf16.mxu0 0
        %923 = vmatpush1.bf16.xpose.msra.mxu0 0
        %924 = vmatprep.subr.bf16.mxu0 0
        %925 = vmatpush1.bf16.xpose.msra.mxu0 0
        %926 = vmatprep.mubr.bf16.mxu0 0
        %927 = vmatmul.mubr.bf16.gmra.mrb[0].mxu0 %v889
        %v928 = vpop.f32.mrb[0].mxu0
        %v929 = vadd.f32 0.0, %v928
        %v930 = vpop.f32.mrb[0].mxu0
        %v931 = vpop.f32.mrb[0].mxu0
        %v932 = vpop.f32.mrb[0].mxu0
        %933 = vdwg.mxu0
        %v934 = vmul.f32 %v929, 0.35355338
        %v935 = vadd.f32 %v934, %v708
        %v936 = vsel %vm656, %v935, -inf
        %937 = vmax.xlane.f32.xlu0 %v936
        %v938 = vpop.xlane.xlu0 %937
        %v939 = vsub.f32 %v935, %v938
        %v940 = vmul.f32 %v939, 1.442695
        %v941 = vpow.pop %v940
        %v942 = vsel %vm656, %v941, 0.0
        %943 = vadd.xlane.f32.xlu0 %v942
        %v944 = vpop.xlane.xlu0 %943
        %v945 = vrcp.pop %v944
        %v946 = vmul.f32 %v941, %v945
        %v947 = vpack.c.bf16 %v946, %v946
        %948 = vrot.lane.b32.xlu0 %v652, 48
        %v949 = vpop.permute.xlu0 %948
        %v951 = vsel %vm656, %v947, 0
        %v954 = vsel %vm728, %v949, 0
        %956 = vmatprep.subr.bf16.mxu0 0
        %957 = vmatpush1.bf16.msra.mxu0 %v954
        %958 = vmatprep.subr.bf16.mxu0 0
        %959 = vmatpush1.bf16.msra.mxu0 0
        %960 = vmatprep.subr.bf16.mxu0 0
        %961 = vmatpush1.bf16.msra.mxu0 0
        %962 = vmatprep.subr.bf16.mxu0 0
        %963 = vmatpush1.bf16.msra.mxu0 0
        %964 = vmatprep.subr.bf16.mxu0 0
        %965 = vmatpush1.bf16.msra.mxu0 0
        %966 = vmatprep.subr.bf16.mxu0 0
        %967 = vmatpush1.bf16.msra.mxu0 0
        %968 = vmatprep.subr.bf16.mxu0 0
        %969 = vmatpush1.bf16.msra.mxu0 0
        %970 = vmatprep.subr.bf16.mxu0 0
        %971 = vmatpush1.bf16.msra.mxu0 0
        %972 = vmatprep.subr.bf16.mxu0 0
        %973 = vmatpush1.bf16.msra.mxu0 0
        %974 = vmatprep.subr.bf16.mxu0 0
        %975 = vmatpush1.bf16.msra.mxu0 0
        %976 = vmatprep.subr.bf16.mxu0 0
        %977 = vmatpush1.bf16.msra.mxu0 0
        %978 = vmatprep.subr.bf16.mxu0 0
        %979 = vmatpush1.bf16.msra.mxu0 0
        %980 = vmatprep.subr.bf16.mxu0 0
        %981 = vmatpush1.bf16.msra.mxu0 0
        %982 = vmatprep.subr.bf16.mxu0 0
        %983 = vmatpush1.bf16.msra.mxu0 0
        %984 = vmatprep.subr.bf16.mxu0 0
        %985 = vmatpush1.bf16.msra.mxu0 0
        %986 = vmatprep.subr.bf16.mxu0 0
        %987 = vmatpush1.bf16.msra.mxu0 0
        %988 = vmatprep.mubr.bf16.mxu0 0
        %989 = vmatmul.mubr.bf16.gmra.mrb[0].mxu0 %v951
        %v990 = vpop.f32.mrb[0].mxu0
        %v991 = vadd.f32 0.0, %v990
        %v992 = vpop.f32.mrb[0].mxu0
        %v993 = vpop.f32.mrb[0].mxu0
        %v994 = vpop.f32.mrb[0].mxu0
        %995 = vdwg.mxu0
        %996 = vrot.lane.b32.xlu0 %v652, 104
        %v997 = vpop.permute.xlu0 %996
        %998 = vrot.lane.b32.xlu0 %v652, 72
        %v999 = vpop.permute.xlu0 %998
        %v1001 = vsel %vm656, %v997, 0
        %v1004 = vsel %vm656, %v999, 0
        %1006 = vmatprep.subr.bf16.mxu0 0
        %1007 = vmatpush1.bf16.xpose.msra.mxu0 %v1004
        %1008 = vmatprep.subr.bf16.mxu0 0
        %1009 = vmatpush1.bf16.xpose.msra.mxu0 0
        %1010 = vmatprep.subr.bf16.mxu0 0
        %1011 = vmatpush1.bf16.xpose.msra.mxu0 0
        %1012 = vmatprep.subr.bf16.mxu0 0
        %1013 = vmatpush1.bf16.xpose.msra.mxu0 0
        %1014 = vmatprep.subr.bf16.mxu0 0
        %1015 = vmatpush1.bf16.xpose.msra.mxu0 0
        %1016 = vmatprep.subr.bf16.mxu0 0
        %1017 = vmatpush1.bf16.xpose.msra.mxu0 0
        %1018 = vmatprep.subr.bf16.mxu0 0
        %1019 = vmatpush1.bf16.xpose.msra.mxu0 0
        %1020 = vmatprep.subr.bf16.mxu0 0
        %1021 = vmatpush1.bf16.xpose.msra.mxu0 0
        %1022 = vmatprep.subr.bf16.mxu0 0
        %1023 = vmatpush1.bf16.xpose.msra.mxu0 0
        %1024 = vmatprep.subr.bf16.mxu0 0
        %1025 = vmatpush1.bf16.xpose.msra.mxu0 0
        %1026 = vmatprep.subr.bf16.mxu0 0
        %1027 = vmatpush1.bf16.xpose.msra.mxu0 0
        %1028 = vmatprep.subr.bf16.mxu0 0
        %1029 = vmatpush1.bf16.xpose.msra.mxu0 0
        %1030 = vmatprep.subr.bf16.mxu0 0
        %1031 = vmatpush1.bf16.xpose.msra.mxu0 0
        %1032 = vmatprep.subr.bf16.mxu0 0
        %1033 = vmatpush1.bf16.xpose.msra.mxu0 0
        %1034 = vmatprep.subr.bf16.mxu0 0
        %1035 = vmatpush1.bf16.xpose.msra.mxu0 0
        %1036 = vmatprep.subr.bf16.mxu0 0
        %1037 = vmatpush1.bf16.xpose.msra.mxu0 0
        %1038 = vmatprep.mubr.bf16.mxu0 0
        %1039 = vmatmul.mubr.bf16.gmra.mrb[0].mxu0 %v1001
        %v1040 = vpop.f32.mrb[0].mxu0
        %v1041 = vadd.f32 0.0, %v1040
        %v1042 = vpop.f32.mrb[0].mxu0
        %v1043 = vpop.f32.mrb[0].mxu0
        %v1044 = vpop.f32.mrb[0].mxu0
        %1045 = vdwg.mxu0
        %v1046 = vmul.f32 %v1041, 0.35355338
        %v1047 = vadd.f32 %v1046, %v708
        %v1048 = vsel %vm656, %v1047, -inf
        %1049 = vmax.xlane.f32.xlu0 %v1048
        %v1050 = vpop.xlane.xlu0 %1049
        %v1051 = vsub.f32 %v1047, %v1050
        %v1052 = vmul.f32 %v1051, 1.442695
        %v1053 = vpow.pop %v1052
        %v1054 = vsel %vm656, %v1053, 0.0
        %1055 = vadd.xlane.f32.xlu0 %v1054
        %v1056 = vpop.xlane.xlu0 %1055
        %v1057 = vrcp.pop %v1056
        %v1058 = vmul.f32 %v1053, %v1057
        %v1059 = vpack.c.bf16 %v1058, %v1058
        %1060 = vrot.lane.b32.xlu0 %v652, 40
        %v1061 = vpop.permute.xlu0 %1060
        %v1063 = vsel %vm656, %v1059, 0
        %v1066 = vsel %vm728, %v1061, 0
        %1068 = vmatprep.subr.bf16.mxu0 0
        %1069 = vmatpush1.bf16.msra.mxu0 %v1066
        %1070 = vmatprep.subr.bf16.mxu0 0
        %1071 = vmatpush1.bf16.msra.mxu0 0
        %1072 = vmatprep.subr.bf16.mxu0 0
        %1073 = vmatpush1.bf16.msra.mxu0 0
        %1074 = vmatprep.subr.bf16.mxu0 0
        %1075 = vmatpush1.bf16.msra.mxu0 0
        %1076 = vmatprep.subr.bf16.mxu0 0
        %1077 = vmatpush1.bf16.msra.mxu0 0
        %1078 = vmatprep.subr.bf16.mxu0 0
        %1079 = vmatpush1.bf16.msra.mxu0 0
        %1080 = vmatprep.subr.bf16.mxu0 0
        %1081 = vmatpush1.bf16.msra.mxu0 0
        %1082 = vmatprep.subr.bf16.mxu0 0
        %1083 = vmatpush1.bf16.msra.mxu0 0
        %1084 = vmatprep.subr.bf16.mxu0 0
        %1085 = vmatpush1.bf16.msra.mxu0 0
        %1086 = vmatprep.subr.bf16.mxu0 0
        %1087 = vmatpush1.bf16.msra.mxu0 0
        %1088 = vmatprep.subr.bf16.mxu0 0
        %1089 = vmatpush1.bf16.msra.mxu0 0
        %1090 = vmatprep.subr.bf16.mxu0 0
        %1091 = vmatpush1.bf16.msra.mxu0 0
        %1092 = vmatprep.subr.bf16.mxu0 0
        %1093 = vmatpush1.bf16.msra.mxu0 0
        %1094 = vmatprep.subr.bf16.mxu0 0
        %1095 = vmatpush1.bf16.msra.mxu0 0
        %1096 = vmatprep.subr.bf16.mxu0 0
        %1097 = vmatpush1.bf16.msra.mxu0 0
        %1098 = vmatprep.subr.bf16.mxu0 0
        %1099 = vmatpush1.bf16.msra.mxu0 0
        %1100 = vmatprep.mubr.bf16.mxu0 0
        %1101 = vmatmul.mubr.bf16.gmra.mrb[0].mxu0 %v1063
        %v1102 = vpop.f32.mrb[0].mxu0
        %v1103 = vadd.f32 0.0, %v1102
        %v1104 = vpop.f32.mrb[0].mxu0
        %v1105 = vpop.f32.mrb[0].mxu0
        %v1106 = vpop.f32.mrb[0].mxu0
        %1107 = vdwg.mxu0
        %1109 = vrot.lane.b32.xlu0 %v834, 8
        %v1110 = vpop.permute.xlu0 %1109
        %1113 = vrot.lane.b32.xlu0 %v946, 16
        %v1114 = vpop.permute.xlu0 %1113
        %1117 = vrot.lane.b32.xlu0 %v1058, 24
        %v1118 = vpop.permute.xlu0 %1117
        %v1120 = vsel %vm656, %v721, %v1110
        %vm1121 = vcmask 130048
        %v1122 = vsel %vm1121, %v1120, %v1114
        %vm1123 = vcmask 195584
        %v1124 = vsel %vm1123, %v1122, %v1118
        %v1125 = vpack.c.bf16 %v1124, %v1124
        %vm1126 = vcmask 257024
        %1127 = vst.msk [vmem:[%s570] sm:$0xf] %vm1126, %v1125
        %1129 = vrot.lane.b32.xlu0 %v879, 8
        %v1130 = vpop.permute.xlu0 %1129
        %1133 = vrot.lane.b32.xlu0 %v991, 16
        %v1134 = vpop.permute.xlu0 %1133
        %1137 = vrot.lane.b32.xlu0 %v1103, 24
        %v1138 = vpop.permute.xlu0 %1137
        %v1140 = vsel %vm656, %v767, %v1130
        %v1141 = vsel %vm1121, %v1140, %v1134
        %v1142 = vsel %vm1123, %v1141, %v1138
        %v1143 = vpack.c.bf16 %v1142, %v1142
        %v1144 = vld [vmem:[%s5] sm:$0xf]
        %v1145 = vld [vmem:[%s5 + $0x4] sm:$0xf]
        %v1146 = vld [vmem:[%s5 + $0x8] sm:$0xf]
        %v1147 = vld [vmem:[%s5 + $0xc] sm:$0xf]
        %v1148 = vld [vmem:[%s6] sm:$0x1]
        %v1150 = vlaneseq
        %v1151 = vshrl.u32 %v1150, 7
        %v1152 = vsub.s32 0, %v1151
        %v1153 = vrot.slane %v1148, %v1152
        %v1159 = vunpack.c.l.b16 %v1144
        %v1160 = vunpack.c.l.b16 %v1145
        %v1161 = vunpack.c.l.b16 %v1146
        %v1162 = vunpack.c.l.b16 %v1147
        %v1163 = vpack.c.b16 %v1160, %v1159
        %v1164 = vpack.c.b16 %v1162, %v1161
        %v1168 = vsel %vm608, %v1143, 0
        %1170 = vmatprep.subr.bf16.mxu0 0
        %1171 = vmatpush1.bf16.msra.mxu0 %v1163
        %1172 = vmatprep.subr.bf16.mxu0 0
        %1173 = vmatpush1.bf16.msra.mxu0 %v1164
        %1174 = vmatprep.subr.bf16.mxu0 0
        %1175 = vmatpush1.bf16.msra.mxu0 0
        %1176 = vmatprep.subr.bf16.mxu0 0
        %1177 = vmatpush1.bf16.msra.mxu0 0
        %1178 = vmatprep.subr.bf16.mxu0 0
        %1179 = vmatpush1.bf16.msra.mxu0 0
        %1180 = vmatprep.subr.bf16.mxu0 0
        %1181 = vmatpush1.bf16.msra.mxu0 0
        %1182 = vmatprep.subr.bf16.mxu0 0
        %1183 = vmatpush1.bf16.msra.mxu0 0
        %1184 = vmatprep.subr.bf16.mxu0 0
        %1185 = vmatpush1.bf16.msra.mxu0 0
        %1186 = vmatprep.subr.bf16.mxu0 0
        %1187 = vmatpush1.bf16.msra.mxu0 0
        %1188 = vmatprep.subr.bf16.mxu0 0
        %1189 = vmatpush1.bf16.msra.mxu0 0
        %1190 = vmatprep.subr.bf16.mxu0 0
        %1191 = vmatpush1.bf16.msra.mxu0 0
        %1192 = vmatprep.subr.bf16.mxu0 0
        %1193 = vmatpush1.bf16.msra.mxu0 0
        %1194 = vmatprep.subr.bf16.mxu0 0
        %1195 = vmatpush1.bf16.msra.mxu0 0
        %1196 = vmatprep.subr.bf16.mxu0 0
        %1197 = vmatpush1.bf16.msra.mxu0 0
        %1198 = vmatprep.subr.bf16.mxu0 0
        %1199 = vmatpush1.bf16.msra.mxu0 0
        %1200 = vmatprep.subr.bf16.mxu0 0
        %1201 = vmatpush1.bf16.msra.mxu0 0
        %1202 = vmatprep.mubr.bf16.mxu0 0
        %1203 = vmatmul.mubr.bf16.gmra.mrb[0].mxu0 %v1168
        %v1204 = vpop.f32.mrb[0].mxu0
        %v1205 = vadd.f32 %v1153, %v1204
        %v1206 = vpop.f32.mrb[0].mxu0
        %v1207 = vpop.f32.mrb[0].mxu0
        %v1208 = vpop.f32.mrb[0].mxu0
        %1209 = vdwg.mxu0
        %v1210 = vadd.f32 %v1205, %v580
        %v1211 = vld [vmem:[%s7] sm:$0x1]
        %v1212 = vld [vmem:[%s8] sm:$0x1]
        %v1213 = vsel %vm608, %v1210, 0.0
        %1214 = vadd.xlane.f32.xlu0 %v1213
        %v1215 = vpop.xlane.xlu0 %1214
        %v1216 = vrcp.pop 32.0
        %v1217 = vmul.f32 %v1215, %v1216
        %v1218 = vsub.f32 %v1210, %v1217
        %v1219 = vmul.f32 %v1218, %v1218
        %v1220 = vsel %vm608, %v1219, 0.0
        %1221 = vadd.xlane.f32.xlu0 %v1220
        %v1222 = vpop.xlane.xlu0 %1221
        %v1223 = vmul.f32 %v1222, %v1216
        %v1224 = vadd.f32 %v1223, 1e-05
        %v1225 = vrsqrt.pop %v1224
        %v1226 = vmul.f32 %v1218, %v1225
        %v1228 = vlaneseq
        %v1229 = vshrl.u32 %v1228, 7
        %v1230 = vsub.s32 0, %v1229
        %v1231 = vrot.slane %v1211, %v1230
        %v1233 = vmul.f32 %v1226, %v1231
        %v1235 = vlaneseq
        %v1236 = vshrl.u32 %v1235, 7
        %v1237 = vsub.s32 0, %v1236
        %v1238 = vrot.slane %v1212, %v1237
        %v1240 = vadd.f32 %v1233, %v1238
        %1242 = vset.pattern.permute.xlu0 0
        %1243 = vperm.xlu0 %1242, %v582
        %v1244 = vpop.permute.xlu0 %1243
        %v1246 = vmul.f32 %v1240, %v1244
        %v1247 = vpack.c.bf16 %v1246, %v1246
        %v1248 = vld [vmem:[%s9] sm:$0xf]
        %v1249 = vld [vmem:[%s9 + $0x4] sm:$0xf]
        %v1250 = vld [vmem:[%s9 + $0x8] sm:$0xf]
        %v1251 = vld [vmem:[%s9 + $0xc] sm:$0xf]
        %v1252 = vld [vmem:[%s10] sm:$0x1]
        %v1254 = vlaneseq
        %v1255 = vshrl.u32 %v1254, 7
        %v1256 = vsub.s32 0, %v1255
        %v1257 = vrot.slane %v1252, %v1256
        %v1263 = vunpack.c.l.b16 %v1248
        %v1264 = vunpack.c.l.b16 %v1249
        %v1265 = vunpack.c.l.b16 %v1250
        %v1266 = vunpack.c.l.b16 %v1251
        %v1267 = vpack.c.b16 %v1264, %v1263
        %v1268 = vpack.c.b16 %v1266, %v1265
        %v1272 = vsel %vm608, %v1247, 0
        %1274 = vmatprep.subr.bf16.mxu0 0
        %1275 = vmatpush1.bf16.msra.mxu0 %v1267
        %1276 = vmatprep.subr.bf16.mxu0 0
        %1277 = vmatpush1.bf16.msra.mxu0 %v1268
        %1278 = vmatprep.subr.bf16.mxu0 0
        %1279 = vmatpush1.bf16.msra.mxu0 0
        %1280 = vmatprep.subr.bf16.mxu0 0
        %1281 = vmatpush1.bf16.msra.mxu0 0
        %1282 = vmatprep.subr.bf16.mxu0 0
        %1283 = vmatpush1.bf16.msra.mxu0 0
        %1284 = vmatprep.subr.bf16.mxu0 0
        %1285 = vmatpush1.bf16.msra.mxu0 0
        %1286 = vmatprep.subr.bf16.mxu0 0
        %1287 = vmatpush1.bf16.msra.mxu0 0
        %1288 = vmatprep.subr.bf16.mxu0 0
        %1289 = vmatpush1.bf16.msra.mxu0 0
        %1290 = vmatprep.subr.bf16.mxu0 0
        %1291 = vmatpush1.bf16.msra.mxu0 0
        %1292 = vmatprep.subr.bf16.mxu0 0
        %1293 = vmatpush1.bf16.msra.mxu0 0
        %1294 = vmatprep.subr.bf16.mxu0 0
        %1295 = vmatpush1.bf16.msra.mxu0 0
        %1296 = vmatprep.subr.bf16.mxu0 0
        %1297 = vmatpush1.bf16.msra.mxu0 0
        %1298 = vmatprep.subr.bf16.mxu0 0
        %1299 = vmatpush1.bf16.msra.mxu0 0
        %1300 = vmatprep.subr.bf16.mxu0 0
        %1301 = vmatpush1.bf16.msra.mxu0 0
        %1302 = vmatprep.subr.bf16.mxu0 0
        %1303 = vmatpush1.bf16.msra.mxu0 0
        %1304 = vmatprep.subr.bf16.mxu0 0
        %1305 = vmatpush1.bf16.msra.mxu0 0
        %1306 = vmatprep.mubr.bf16.mxu0 0
        %1307 = vmatmul.mubr.bf16.gmra.mrb[0].mxu0 %v1272
        %v1308 = vpop.f32.mrb[0].mxu0
        %v1309 = vadd.f32 %v1257, %v1308
        %v1310 = vpop.f32.mrb[0].mxu0
        %v1311 = vpop.f32.mrb[0].mxu0
        %v1312 = vpop.f32.mrb[0].mxu0
        %1313 = vdwg.mxu0
        %v1314 = vmax.f32 %v1309, 0.0
        %v1315 = vpack.c.bf16 %v1314, %v1314
        %v1316 = vld [vmem:[%s11] sm:$0xf]
        %v1317 = vld [vmem:[%s11 + $0x4] sm:$0xf]
        %v1318 = vld [vmem:[%s11 + $0x8] sm:$0xf]
        %v1319 = vld [vmem:[%s11 + $0xc] sm:$0xf]
        %v1320 = vld [vmem:[%s11 + $0x10] sm:$0xf]
        %v1321 = vld [vmem:[%s11 + $0x14] sm:$0xf]
        %v1322 = vld [vmem:[%s11 + $0x18] sm:$0xf]
        %v1323 = vld [vmem:[%s11 + $0x1c] sm:$0xf]
        %v1324 = vld [vmem:[%s12] sm:$0x1]
        %v1326 = vlaneseq
        %v1327 = vshrl.u32 %v1326, 7
        %v1328 = vsub.s32 0, %v1327
        %v1329 = vrot.slane %v1324, %v1328
        %v1339 = vunpack.c.l.b16 %v1316
        %v1340 = vunpack.c.l.b16 %v1317
        %v1341 = vunpack.c.l.b16 %v1318
        %v1342 = vunpack.c.l.b16 %v1319
        %v1343 = vunpack.c.l.b16 %v1320
        %v1344 = vunpack.c.l.b16 %v1321
        %v1345 = vunpack.c.l.b16 %v1322
        %v1346 = vunpack.c.l.b16 %v1323
        %v1347 = vpack.c.b16 %v1340, %v1339
        %v1348 = vpack.c.b16 %v1342, %v1341
        %v1349 = vpack.c.b16 %v1344, %v1343
        %v1350 = vpack.c.b16 %v1346, %v1345
        %vm1355 = vcmask 523264
        %v1357 = vsel %vm1355, %v1315, 0
        %1359 = vmatprep.subr.bf16.mxu0 0
        %1360 = vmatpush1.bf16.msra.mxu0 %v1347
        %1361 = vmatprep.subr.bf16.mxu0 0
        %1362 = vmatpush1.bf16.msra.mxu0 %v1348
        %1363 = vmatprep.subr.bf16.mxu0 0
        %1364 = vmatpush1.bf16.msra.mxu0 %v1349
        %1365 = vmatprep.subr.bf16.mxu0 0
        %1366 = vmatpush1.bf16.msra.mxu0 %v1350
        %1367 = vmatprep.subr.bf16.mxu0 0
        %1368 = vmatpush1.bf16.msra.mxu0 0
        %1369 = vmatprep.subr.bf16.mxu0 0
        %1370 = vmatpush1.bf16.msra.mxu0 0
        %1371 = vmatprep.subr.bf16.mxu0 0
        %1372 = vmatpush1.bf16.msra.mxu0 0
        %1373 = vmatprep.subr.bf16.mxu0 0
        %1374 = vmatpush1.bf16.msra.mxu0 0
        %1375 = vmatprep.subr.bf16.mxu0 0
        %1376 = vmatpush1.bf16.msra.mxu0 0
        %1377 = vmatprep.subr.bf16.mxu0 0
        %1378 = vmatpush1.bf16.msra.mxu0 0
        %1379 = vmatprep.subr.bf16.mxu0 0
        %1380 = vmatpush1.bf16.msra.mxu0 0
        %1381 = vmatprep.subr.bf16.mxu0 0
        %1382 = vmatpush1.bf16.msra.mxu0 0
        %1383 = vmatprep.subr.bf16.mxu0 0
        %1384 = vmatpush1.bf16.msra.mxu0 0
        %1385 = vmatprep.subr.bf16.mxu0 0
        %1386 = vmatpush1.bf16.msra.mxu0 0
        %1387 = vmatprep.subr.bf16.mxu0 0
        %1388 = vmatpush1.bf16.msra.mxu0 0
        %1389 = vmatprep.subr.bf16.mxu0 0
        %1390 = vmatpush1.bf16.msra.mxu0 0
        %1391 = vmatprep.mubr.bf16.mxu0 0
        %1392 = vmatmul.mubr.bf16.gmra.mrb[0].mxu0 %v1357
        %v1393 = vpop.f32.mrb[0].mxu0
        %v1394 = vadd.f32 %v1329, %v1393
        %v1395 = vpop.f32.mrb[0].mxu0
        %v1396 = vpop.f32.mrb[0].mxu0
        %v1397 = vpop.f32.mrb[0].mxu0
        %1398 = vdwg.mxu0
        %v1399 = vadd.f32 %v1394, %v1246
        %v1400 = vld [vmem:[%s13] sm:$0x1]
        %v1401 = vld [vmem:[%s14] sm:$0x1]
        %v1402 = vsel %vm608, %v1399, 0.0
        %1403 = vadd.xlane.f32.xlu0 %v1402
        %v1404 = vpop.xlane.xlu0 %1403
        %v1405 = vmul.f32 %v1404, %v1216
        %v1406 = vsub.f32 %v1399, %v1405
        %v1407 = vmul.f32 %v1406, %v1406
        %v1408 = vsel %vm608, %v1407, 0.0
        %1409 = vadd.xlane.f32.xlu0 %v1408
        %v1410 = vpop.xlane.xlu0 %1409
        %v1411 = vmul.f32 %v1410, %v1216
        %v1412 = vadd.f32 %v1411, 1e-05
        %v1413 = vrsqrt.pop %v1412
        %v1414 = vmul.f32 %v1406, %v1413
        %v1416 = vlaneseq
        %v1417 = vshrl.u32 %v1416, 7
        %v1418 = vsub.s32 0, %v1417
        %v1419 = vrot.slane %v1400, %v1418
        %v1421 = vmul.f32 %v1414, %v1419
        %v1423 = vlaneseq
        %v1424 = vshrl.u32 %v1423, 7
        %v1425 = vsub.s32 0, %v1424
        %v1426 = vrot.slane %v1401, %v1425
        %v1428 = vadd.f32 %v1421, %v1426
        %v1429 = vmul.f32 %v1428, %v1244
        %1430 = vst.msk [vmem:[%s563] sm:$0xff] %vm608, %v1429
        %s1431 = sand.u32 %s375, 1
        %s1432 = scalar_lea.sflag [#allocation4], %s1431
        %s1433 = sand.u32 %s375, 1
        %s1434 = smul.addr %s1433, 8
        %s1435 = scalar_lea.vmem [#allocation5], %s1434
        %s1436 = sand.u32 %s401, 1
        %s1437 = scalar_lea.sflag [#allocation7], %s1436
        %s1438 = sand.u32 %s401, 1
        %s1439 = smul.addr %s1438, 4
        %s1440 = scalar_lea.vmem [#allocation6], %s1439
        // Predicated region
        $region85: #{tpu_custom_call.1} parent=79 // pred_check
          %p1441 = pneg %p385
        $region86: #{tpu_custom_call.1} parent=79 // pred_check_branch
          %1443 = sbr.rel (%p1441) target = $region88
        $region87: #{tpu_custom_call.1} parent=79 // pred_region
          %s1445 = ssub.s32 128, 128
          %1446 = vsyncadd %s1432, %s1445
          %s1447 = smul.addr %s37, 128
          %s1448 = scalar_lea.hbm %s15, %s1447
          %s1450 = sshll.u32 %s1435, 4
          %s1451 = int_to_ptr.vmem [resolvable:$true] %s1450
          %1453 = dma.vmem_to_hbm [thread:$0]  %s1451, 128, %s1448, %s1432
        $region88: #{tpu_custom_call.1} parent=79 // pred_fallthru
          _
        // Predicated region
        $region89: #{tpu_custom_call.1} parent=79 // pred_check
          %p1454 = pneg %p411
        $region90: #{tpu_custom_call.1} parent=79 // pred_check_branch
          %1456 = sbr.rel (%p1454) target = $region92
        $region91: #{tpu_custom_call.1} parent=79 // pred_region
          %s1458 = ssub.s32 64, 64
          %1459 = vsyncadd %s1437, %s1458
          %s1460 = smul.addr %s37, 64
          %s1461 = scalar_lea.hbm %s16, %s1460
          %s1463 = sshll.u32 %s1440, 4
          %s1464 = int_to_ptr.vmem [resolvable:$true] %s1463
          %1466 = dma.vmem_to_hbm [thread:$0]  %s1464, 64, %s1461, %s1437
        $region92: #{tpu_custom_call.1} parent=79 // pred_fallthru
          _
      $region80: #{tpu_custom_call.1} parent=5 // pred_fallthru
        _
      %p1467 = scmp.le.s32.totalorder 2, %s32
      // Predicated region
      $region93: #{tpu_custom_call.1} parent=5 // pred_check
        %p1468 = pneg %p1467
      $region94: #{tpu_custom_call.1} parent=5 // pred_check_branch
        %1470 = sbr.rel (%p1468) target = $region96
      $region95: #{tpu_custom_call.1} parent=5 // pred_region
        %s1471 = ssub.s32 %s32, 2
        // Predicated region
        $region97: #{tpu_custom_call.1} parent=95 // pred_check
          %p1472 = pneg %p391
        $region98: #{tpu_custom_call.1} parent=95 // pred_check_branch
          %1474 = sbr.rel (%p1472) target = $region100
        $region99: #{tpu_custom_call.1} parent=95 // pred_region
          %s1475 = sand.u32 %s376, 1
          %s1476 = scalar_lea.sflag [#allocation4], %s1475
          %s1477 = sand.u32 %s376, 1
          %s1478 = smul.addr %s1477, 8
          %s1479 = scalar_lea.vmem [#allocation5], %s1478
          %1480 = dma.done %s1476, 128
        $region100: #{tpu_custom_call.1} parent=95 // pred_fallthru
          _
        // Predicated region
        $region101: #{tpu_custom_call.1} parent=95 // pred_check
          %p1481 = pneg %p417
        $region102: #{tpu_custom_call.1} parent=95 // pred_check_branch
          %1483 = sbr.rel (%p1481) target = $region104
        $region103: #{tpu_custom_call.1} parent=95 // pred_region
          %s1484 = sand.u32 %s402, 1
          %s1485 = scalar_lea.sflag [#allocation7], %s1484
          %s1486 = sand.u32 %s402, 1
          %s1487 = smul.addr %s1486, 4
          %s1488 = scalar_lea.vmem [#allocation6], %s1487
          %1489 = dma.done %s1485, 64
        $region104: #{tpu_custom_call.1} parent=95 // pred_fallthru
          _
      $region96: #{tpu_custom_call.1} parent=5 // pred_fallthru
        _
    $region6: #{tpu_custom_call.1} parent=1 // loop_footer
      %s36 = sadd.s32 1, %s32
    $region7: #{tpu_custom_call.1} parent=1 // loop_footer_branch
      %31 = sbr.rel target = $region3
    $region8: #{tpu_custom_call.1} parent=1 // loop_exit
      _
    %1490 = vsyncpa [#allocation3], 1
    %s1491 = scalar_lea.sflag [#allocation3], 1
    %1492 = vsyncpa %s1491, 1
    %1493 = vsyncpa [#allocation4], 1
    %s1494 = scalar_lea.sflag [#allocation4], 1
    %1495 = vsyncpa %s1494, 1
    %1496 = vsyncpa [#allocation7], 1
    %s1497 = scalar_lea.sflag [#allocation7], 1
    %1498 = vsyncpa %s1497, 1

</llo_original>
